<compile_context>
chip_gen: v7x
topology: tpu7x:2x2x1
jax: 0.10.0
libtpu: 0.0.40
codegen_flags: <defaults>
</compile_context>

<pallas_src>
import numpy as np
import jax
import jax.numpy as jnp
from jax.experimental import pallas as pl
from jax.experimental.pallas import tpu as pltpu


def _caption_kernel(xfeat_ref, wseq_ref,
                    w1_ref, b1_ref,
                    wih_x_ref, wih_w_ref, b_gate_ref,
                    whh_ref,
                    w2_hbm_ref, b2_ref,
                    out_ref,
                    w2_vmem, dma_sem):
    """Whole caption decode in one kernel invocation.

    xfeat:   (B, F)        bf16 image features
    wseq:    (steps*B, E)  bf16 teacher-forcing word embeddings (row t*B+b = step t)
    w2_hbm:  (H, V)        bf16 fc2 weight, raw HBM ref (manually DMA'd)
    out:     (steps*B, V)  f32 log-softmax, rows [t*B:(t+1)*B] = step t
    """
    B = xfeat_ref.shape[0]
    H = whh_ref.shape[0]
    SB = wseq_ref.shape[0]
    steps = SB // B

    # Kick off the fc2 weight transfer immediately; it overlaps the one-time
    # prework and the whole recurrence, and is single-buffered in VMEM.
    w2_cp = pltpu.make_async_copy(w2_hbm_ref, w2_vmem, dma_sem.at[0])
    w2_cp.start()

    # ---- one-time work (hoisted off the recurrence) ----
    # fc1: Linear(image_features_size -> lstm_hidden_size), bf16 @ bf16 -> f32
    xproj = (jnp.dot(xfeat_ref[...], w1_ref[...],
                     preferred_element_type=jnp.float32) + b1_ref[...])
    # Image half of the LSTMCell gate pre-activation with b_ih + b_hh folded in.
    gates_x = (jnp.dot(xproj.astype(jnp.bfloat16), wih_x_ref[...],
                       preferred_element_type=jnp.float32) + b_gate_ref[...])
    # Word half for ALL steps as one batched matmul (better MXU row fill).
    wproj = jnp.dot(wseq_ref[...], wih_w_ref[...],
                    preferred_element_type=jnp.float32)            # (steps*B, 4H)
    # Fold the time-invariant half in once, off the serial path.
    gpre = wproj + jnp.concatenate([gates_x] * steps, axis=0)       # (steps*B, 4H)

    whh = whh_ref[...]                                              # bf16 (H, 4H)

    # ---- recurrence, fully unrolled: only h @ W_hh per step ----
    h = jnp.zeros((B, H), jnp.float32)
    c = jnp.zeros((B, H), jnp.float32)
    hs = []
    for t in range(steps):  # static trip count -> fully unrolled
        gates = (gpre[t * B:(t + 1) * B, :]
                 + jnp.dot(h.astype(jnp.bfloat16), whh,
                           preferred_element_type=jnp.float32))     # (B, 4H)
        i_g = jax.nn.sigmoid(gates[:, 0 * H:1 * H])
        f_g = jax.nn.sigmoid(gates[:, 1 * H:2 * H])
        g_g = jnp.tanh(gates[:, 2 * H:3 * H])
        o_g = jax.nn.sigmoid(gates[:, 3 * H:4 * H])
        c = f_g * c + i_g * g_g
        h = o_g * jnp.tanh(c)
        hs.append(h)                                                # stays in vregs

    h_all = jnp.concatenate(hs, axis=0)                             # (steps*B, H)

    # ---- batched fc2 + LogSoftmax over all steps at once ----
    w2_cp.wait()   # DMA has had the whole recurrence to complete
    logits = (jnp.dot(h_all.astype(jnp.bfloat16), w2_vmem[...],
                      preferred_element_type=jnp.float32) + b2_ref[...])
    m = jnp.max(logits, axis=-1, keepdims=True)
    lse = m + jnp.log(jnp.sum(jnp.exp(logits - m), axis=-1, keepdims=True))
    out_ref[...] = logits - lse


def caption_forward(X, labels, params, max_sentence_len):
    """Pallas implementation of forward_train.

    X:      (B, F) float32 image features (CNN is "preloaded")
    labels: (T, B) int32 teacher-forcing word ids, T = max_sentence_len
    returns (B, T, V) float32: slot 0 = start one-hot, slots 1..T-1 = log-probs
    """
    B, F = X.shape
    T = max_sentence_len
    H = params["w1"].shape[1]
    E = params["embedding"].shape[1]
    V = params["w2"].shape[1]
    steps = T - 1
    bf16 = jnp.bfloat16

    # Word fed to the LSTM at kernel step t: start symbol for t=0, label[t] for
    # t>=1 (matches ids_to_embed + teacher forcing in forward_train).  Only the
    # gather stays in the wrapper; the projection matmul is fused in-kernel.
    start_embed = params["embedding"][params["start_id"]]            # (E,)
    wseq = jnp.take(params["embedding"], labels[1:steps], axis=0)    # (steps-1, B, E)
    wseq = jnp.concatenate(
        [jnp.broadcast_to(start_embed, (1, B, E)), wseq], axis=0)    # (steps, B, E)
    wseq = wseq.reshape(steps * B, E).astype(bf16)

    # bf16 at the MXU boundary; biases stay f32.
    X_bf = X.astype(bf16)
    w1 = params["w1"].astype(bf16)
    wih_x = params["wih_x"].astype(bf16)
    wih_w = params["wih_w"].astype(bf16)
    whh = params["whh"].astype(bf16)
    w2 = params["w2"].astype(bf16)

    grid_spec = pltpu.PrefetchScalarGridSpec(
        num_scalar_prefetch=0,
        grid=(1,),  # single invocation: whole recurrence unrolled in-kernel
        in_specs=[
            pl.BlockSpec((B, F), lambda i: (0, 0)),                  # X features (bf16)
            pl.BlockSpec((steps * B, E), lambda i: (0, 0)),          # word embeds (bf16)
            pl.BlockSpec((F, H), lambda i: (0, 0)),                  # fc1 weight
            pl.BlockSpec((1, H), lambda i: (0, 0)),                  # fc1 bias
            pl.BlockSpec((H, 4 * H), lambda i: (0, 0)),              # W_ih (image part)
            pl.BlockSpec((E, 4 * H), lambda i: (0, 0)),              # W_ih (word part)
            pl.BlockSpec((1, 4 * H), lambda i: (0, 0)),              # b_ih + b_hh
            pl.BlockSpec((H, 4 * H), lambda i: (0, 0)),              # W_hh
            pl.BlockSpec(memory_space=pl.ANY),                       # fc2 weight (HBM)
            pl.BlockSpec((1, V), lambda i: (0, 0)),                  # fc2 bias
        ],
        out_specs=pl.BlockSpec((steps * B, V), lambda i: (0, 0)),    # lane-dense V
        scratch_shapes=[
            pltpu.VMEM((H, V), bf16),          # single-buffered fc2 weight
            pltpu.SemaphoreType.DMA((1,)),     # w2 copy completion
        ],
    )

    logprobs = pl.pallas_call(
        _caption_kernel,
        out_shape=jax.ShapeDtypeStruct((steps * B, V), jnp.float32),
        grid_spec=grid_spec,
        compiler_params=pltpu.CompilerParams(
            dimension_semantics=("arbitrary",)),
    )(X_bf, wseq,
      w1, params["b1"],
      wih_x, wih_w, params["b_gate"],
      whh,
      w2, params["b2"])

    logprobs = logprobs.reshape(steps, B, V)                          # (steps, B, V)
    start_onehot = jax.nn.one_hot(
        jnp.full((B,), params["start_id"], dtype=jnp.int32), V, dtype=jnp.float32)
    result = jnp.concatenate(
        [start_onehot[:, None, :], jnp.transpose(logprobs, (1, 0, 2))], axis=1)
    return result  # (B, T, V)


def caption_forward_ref(X, labels, params, max_sentence_len):
    """Pure-JAX reference with the same (intentional) bf16-at-MXU numerics."""
    def bdot(a, b):
        return jnp.dot(a.astype(jnp.bfloat16), b.astype(jnp.bfloat16),
                       preferred_element_type=jnp.float32)

    B, _ = X.shape
    T = max_sentence_len
    H = params["w1"].shape[1]
    V = params["w2"].shape[1]

    xproj = bdot(X, params["w1"]) + params["b1"]
    h = jnp.zeros((B, H), jnp.float32)
    c = jnp.zeros((B, H), jnp.float32)
    word = jnp.broadcast_to(params["embedding"][params["start_id"]],
                            (B, params["embedding"].shape[1]))

    outs = [jax.nn.one_hot(jnp.full((B,), params["start_id"], dtype=jnp.int32),
                           V, dtype=jnp.float32)]
    for idx in range(1, T):
        gates = (bdot(xproj, params["wih_x"]) + bdot(word, params["wih_w"])
                 + bdot(h, params["whh"]) + params["b_gate"])
        i_g = jax.nn.sigmoid(gates[:, 0 * H:1 * H])
        f_g = jax.nn.sigmoid(gates[:, 1 * H:2 * H])
        g_g = jnp.tanh(gates[:, 2 * H:3 * H])
        o_g = jax.nn.sigmoid(gates[:, 3 * H:4 * H])
        c = f_g * c + i_g * g_g
        h = o_g * jnp.tanh(c)
        logits = bdot(h, params["w2"]) + params["b2"]
        outs.append(jax.nn.log_softmax(logits, axis=-1))
        word = params["embedding"][labels[idx]]  # teacher forcing
    return jnp.stack(outs, axis=1)


def make_params(key, F, H, E, V):
    ks = jax.random.split(key, 8)
    s = 0.05
    return {
        "w1": s * jax.random.normal(ks[0], (F, H), jnp.float32),
        "b1": s * jax.random.normal(ks[1], (1, H), jnp.float32),
        # nn.LSTMCell(H + E, H): W_ih split into [fc1(X) | word] column blocks,
        # pre-transposed; b_gate = b_ih + b_hh pre-summed.
        "wih_x": s * jax.random.normal(ks[2], (H, 4 * H), jnp.float32),
        "wih_w": s * jax.random.normal(ks[3], (E, 4 * H), jnp.float32),
        "whh": s * jax.random.normal(ks[4], (H, 4 * H), jnp.float32),
        "b_gate": s * jax.random.normal(ks[5], (1, 4 * H), jnp.float32),
        "w2": s * jax.random.normal(ks[6], (H, V), jnp.float32),
        "b2": s * jax.random.normal(ks[7], (1, V), jnp.float32),
        # pretrained word_embedding lookup table (rows = vocab ids)
        "embedding": 0.1 * jax.random.normal(jax.random.fold_in(key, 99), (V, E), jnp.float32),
        "start_id": 1,  # words2ids[DEF_START]
    }


if __name__ == "__main__":
    # Small, TPU-tile-friendly shapes consistent with the module's forward:
    B = 8            # batch
    F = 256          # image_features_size (CNN features are preloaded)
    H = 128          # lstm_hidden_size
    E = 128          # word_embedding_size
    V = 256          # vocab_size = len(words2ids)
    T = 6            # max_sentence_len

    key = jax.random.PRNGKey(0)
    k_par, k_x, k_lab = jax.random.split(key, 3)

    params = make_params(k_par, F, H, E, V)
    X = jax.random.normal(k_x, (B, F), jnp.float32)
    labels = jax.random.randint(k_lab, (T, B), 0, V, dtype=jnp.int32)

    out = caption_forward(X, labels, params, T)
    out = jax.block_until_ready(out)

    ref = jax.block_until_ready(caption_forward_ref(X, labels, params, T))
    np.testing.assert_allclose(np.asarray(out), np.asarray(ref), rtol=1e-3, atol=1e-3)

    print("KERNEL_OK")
</pallas_src>

<mosaic_0001>
module attributes {stable_mosaic.version = 11 : i64} {
  func.func @_caption_kernel(%arg0: i32, %arg1: memref<8x256xbf16, #tpu.memory_space<vmem>>, %arg2: memref<40x128xbf16, #tpu.memory_space<vmem>>, %arg3: memref<256x128xbf16, #tpu.memory_space<vmem>>, %arg4: memref<1x128xf32, #tpu.memory_space<vmem>>, %arg5: memref<128x512xbf16, #tpu.memory_space<vmem>>, %arg6: memref<128x512xbf16, #tpu.memory_space<vmem>>, %arg7: memref<1x512xf32, #tpu.memory_space<vmem>>, %arg8: memref<128x512xbf16, #tpu.memory_space<vmem>>, %arg9: memref<128x256xbf16, #tpu.memory_space<any>>, %arg10: memref<1x256xf32, #tpu.memory_space<vmem>>, %arg11: memref<40x256xf32, #tpu.memory_space<vmem>>, %arg12: memref<128x256xbf16, #tpu.memory_space<vmem>>, %arg13: memref<1x!tpu.dma_semaphore, #tpu.memory_space<semaphore_mem>>) attributes {dimension_semantics = [#tpu.dimension_semantics<arbitrary>], iteration_bounds = array<i64: 1>, scalar_prefetch = 0 : i64, scratch_operands = 2 : i64, tpu.core_type = #tpu.core_type<tc>, window_params = [{pipeline_mode = #tpu.pipeline_mode<synchronous>, transform_indices = @transform_0, window_bounds = array<i64: 8, 256>}, {pipeline_mode = #tpu.pipeline_mode<synchronous>, transform_indices = @transform_1, window_bounds = array<i64: 40, 128>}, {pipeline_mode = #tpu.pipeline_mode<synchronous>, transform_indices = @transform_2, window_bounds = array<i64: 256, 128>}, {pipeline_mode = #tpu.pipeline_mode<synchronous>, transform_indices = @transform_3, window_bounds = array<i64: 1, 128>}, {pipeline_mode = #tpu.pipeline_mode<synchronous>, transform_indices = @transform_4, window_bounds = array<i64: 128, 512>}, {pipeline_mode = #tpu.pipeline_mode<synchronous>, transform_indices = @transform_5, window_bounds = array<i64: 128, 512>}, {pipeline_mode = #tpu.pipeline_mode<synchronous>, transform_indices = @transform_6, window_bounds = array<i64: 1, 512>}, {pipeline_mode = #tpu.pipeline_mode<synchronous>, transform_indices = @transform_7, window_bounds = array<i64: 128, 512>}, {}, {pipeline_mode = #tpu.pipeline_mode<synchronous>, transform_indices = @transform_9, window_bounds = array<i64: 1, 256>}, {pipeline_mode = #tpu.pipeline_mode<synchronous>, transform_indices = @transform_10, window_bounds = array<i64: 40, 256>}]} {
    %c0_i32 = arith.constant 0 : i32
    %0 = tpu.memref_slice %arg13[%c0_i32] : memref<1x!tpu.dma_semaphore, #tpu.memory_space<semaphore_mem>> -> memref<1x!tpu.dma_semaphore, #tpu.memory_space<semaphore_mem>>
    %1 = tpu.memref_squeeze %0 : memref<1x!tpu.dma_semaphore, #tpu.memory_space<semaphore_mem>> -> memref<!tpu.dma_semaphore, #tpu.memory_space<semaphore_mem>>
    tpu.enqueue_dma source(%arg9 : memref<128x256xbf16, #tpu.memory_space<any>>) target(%arg12 : memref<128x256xbf16, #tpu.memory_space<vmem>>) target_semaphore(%1 : memref<!tpu.dma_semaphore, #tpu.memory_space<semaphore_mem>>)
    %c0 = arith.constant 0 : index
    %c0_0 = arith.constant 0 : index
    %2 = vector.load %arg1[%c0, %c0_0] : memref<8x256xbf16, #tpu.memory_space<vmem>>, vector<8x256xbf16>
    %c0_1 = arith.constant 0 : index
    %c0_2 = arith.constant 0 : index
    %3 = vector.load %arg3[%c0_1, %c0_2] : memref<256x128xbf16, #tpu.memory_space<vmem>>, vector<256x128xbf16>
    %cst = arith.constant dense<0.000000e+00> : vector<8x128xf32>
    %4 = tpu.matmul %2, %3, %cst {dimension_numbers = #tpu.dot_dimension_numbers<[1], [0], [0], [1], [0, 0, 1, 1], [], []>} : vector<8x256xbf16>, vector<256x128xbf16>, vector<8x128xf32> -> vector<8x128xf32>
    %c0_3 = arith.constant 0 : index
    %c0_4 = arith.constant 0 : index
    %5 = vector.load %arg4[%c0_3, %c0_4] : memref<1x128xf32, #tpu.memory_space<vmem>>, vector<1x128xf32>
    %6 = vector.broadcast %5 : vector<1x128xf32> to vector<8x128xf32>
    %7 = arith.addf %4, %6 : vector<8x128xf32>
    %8 = arith.truncf %7 : vector<8x128xf32> to vector<8x128xbf16>
    %c0_5 = arith.constant 0 : index
    %c0_6 = arith.constant 0 : index
    %9 = vector.load %arg5[%c0_5, %c0_6] : memref<128x512xbf16, #tpu.memory_space<vmem>>, vector<128x512xbf16>
    %cst_7 = arith.constant dense<0.000000e+00> : vector<8x512xf32>
    %10 = tpu.matmul %8, %9, %cst_7 {dimension_numbers = #tpu.dot_dimension_numbers<[1], [0], [0], [1], [0, 0, 1, 1], [], []>} : vector<8x128xbf16>, vector<128x512xbf16>, vector<8x512xf32> -> vector<8x512xf32>
    %c0_8 = arith.constant 0 : index
    %c0_9 = arith.constant 0 : index
    %11 = vector.load %arg7[%c0_8, %c0_9] : memref<1x512xf32, #tpu.memory_space<vmem>>, vector<1x512xf32>
    %12 = vector.broadcast %11 : vector<1x512xf32> to vector<8x512xf32>
    %13 = arith.addf %10, %12 : vector<8x512xf32>
    %c0_10 = arith.constant 0 : index
    %c0_11 = arith.constant 0 : index
    %14 = vector.load %arg2[%c0_10, %c0_11] : memref<40x128xbf16, #tpu.memory_space<vmem>>, vector<40x128xbf16>
    %c0_12 = arith.constant 0 : index
    %c0_13 = arith.constant 0 : index
    %15 = vector.load %arg6[%c0_12, %c0_13] : memref<128x512xbf16, #tpu.memory_space<vmem>>, vector<128x512xbf16>
    %cst_14 = arith.constant dense<0.000000e+00> : vector<40x512xf32>
    %16 = tpu.matmul %14, %15, %cst_14 {dimension_numbers = #tpu.dot_dimension_numbers<[1], [0], [0], [1], [0, 0, 1, 1], [], []>} : vector<40x128xbf16>, vector<128x512xbf16>, vector<40x512xf32> -> vector<40x512xf32>
    %17 = tpu.concatenate %13, %13, %13, %13, %13 in 0 : vector<8x512xf32>, vector<8x512xf32>, vector<8x512xf32>, vector<8x512xf32>, vector<8x512xf32> -> vector<40x512xf32>
    %18 = arith.addf %16, %17 : vector<40x512xf32>
    %c0_15 = arith.constant 0 : index
    %c0_16 = arith.constant 0 : index
    %19 = vector.load %arg8[%c0_15, %c0_16] : memref<128x512xbf16, #tpu.memory_space<vmem>>, vector<128x512xbf16>
    %cst_17 = arith.constant 0.000000e+00 : f32
    %20 = vector.broadcast %cst_17 : f32 to vector<8x128xf32>
    %cst_18 = arith.constant 0.000000e+00 : f32
    %21 = vector.broadcast %cst_18 : f32 to vector<8x128xf32>
    %22 = vector.extract_strided_slice %18 {offsets = [0, 0], sizes = [8, 512], strides = [1, 1]} : vector<40x512xf32> to vector<8x512xf32>
    %23 = arith.truncf %20 : vector<8x128xf32> to vector<8x128xbf16>
    %cst_19 = arith.constant dense<0.000000e+00> : vector<8x512xf32>
    %24 = tpu.matmul %23, %19, %cst_19 {dimension_numbers = #tpu.dot_dimension_numbers<[1], [0], [0], [1], [0, 0, 1, 1], [], []>} : vector<8x128xbf16>, vector<128x512xbf16>, vector<8x512xf32> -> vector<8x512xf32>
    %25 = arith.addf %22, %24 : vector<8x512xf32>
    %26 = vector.extract_strided_slice %25 {offsets = [0, 0], sizes = [8, 128], strides = [1, 1]} : vector<8x512xf32> to vector<8x128xf32>
    %27 = arith.negf %26 : vector<8x128xf32>
    %28 = math.exp %27 : vector<8x128xf32>
    %cst_20 = arith.constant 1.000000e+00 : f32
    %29 = vector.broadcast %cst_20 : f32 to vector<8x128xf32>
    %30 = arith.addf %29, %28 : vector<8x128xf32>
    %31 = arith.divf %29, %30 : vector<8x128xf32>
    %32 = vector.extract_strided_slice %25 {offsets = [0, 128], sizes = [8, 128], strides = [1, 1]} : vector<8x512xf32> to vector<8x128xf32>
    %33 = arith.negf %32 : vector<8x128xf32>
    %34 = math.exp %33 : vector<8x128xf32>
    %cst_21 = arith.constant 1.000000e+00 : f32
    %35 = vector.broadcast %cst_21 : f32 to vector<8x128xf32>
    %36 = arith.addf %35, %34 : vector<8x128xf32>
    %37 = arith.divf %35, %36 : vector<8x128xf32>
    %38 = vector.extract_strided_slice %25 {offsets = [0, 256], sizes = [8, 128], strides = [1, 1]} : vector<8x512xf32> to vector<8x128xf32>
    %39 = math.tanh %38 : vector<8x128xf32>
    %40 = vector.extract_strided_slice %25 {offsets = [0, 384], sizes = [8, 128], strides = [1, 1]} : vector<8x512xf32> to vector<8x128xf32>
    %41 = arith.negf %40 : vector<8x128xf32>
    %42 = math.exp %41 : vector<8x128xf32>
    %cst_22 = arith.constant 1.000000e+00 : f32
    %43 = vector.broadcast %cst_22 : f32 to vector<8x128xf32>
    %44 = arith.addf %43, %42 : vector<8x128xf32>
    %45 = arith.divf %43, %44 : vector<8x128xf32>
    %46 = arith.mulf %37, %21 : vector<8x128xf32>
    %47 = arith.mulf %31, %39 : vector<8x128xf32>
    %48 = arith.addf %46, %47 : vector<8x128xf32>
    %49 = math.tanh %48 : vector<8x128xf32>
    %50 = arith.mulf %45, %49 : vector<8x128xf32>
    %51 = vector.extract_strided_slice %18 {offsets = [8, 0], sizes = [8, 512], strides = [1, 1]} : vector<40x512xf32> to vector<8x512xf32>
    %52 = arith.truncf %50 : vector<8x128xf32> to vector<8x128xbf16>
    %cst_23 = arith.constant dense<0.000000e+00> : vector<8x512xf32>
    %53 = tpu.matmul %52, %19, %cst_23 {dimension_numbers = #tpu.dot_dimension_numbers<[1], [0], [0], [1], [0, 0, 1, 1], [], []>} : vector<8x128xbf16>, vector<128x512xbf16>, vector<8x512xf32> -> vector<8x512xf32>
    %54 = arith.addf %51, %53 : vector<8x512xf32>
    %55 = vector.extract_strided_slice %54 {offsets = [0, 0], sizes = [8, 128], strides = [1, 1]} : vector<8x512xf32> to vector<8x128xf32>
    %56 = arith.negf %55 : vector<8x128xf32>
    %57 = math.exp %56 : vector<8x128xf32>
    %cst_24 = arith.constant 1.000000e+00 : f32
    %58 = vector.broadcast %cst_24 : f32 to vector<8x128xf32>
    %59 = arith.addf %58, %57 : vector<8x128xf32>
    %60 = arith.divf %58, %59 : vector<8x128xf32>
    %61 = vector.extract_strided_slice %54 {offsets = [0, 128], sizes = [8, 128], strides = [1, 1]} : vector<8x512xf32> to vector<8x128xf32>
    %62 = arith.negf %61 : vector<8x128xf32>
    %63 = math.exp %62 : vector<8x128xf32>
    %cst_25 = arith.constant 1.000000e+00 : f32
    %64 = vector.broadcast %cst_25 : f32 to vector<8x128xf32>
    %65 = arith.addf %64, %63 : vector<8x128xf32>
    %66 = arith.divf %64, %65 : vector<8x128xf32>
    %67 = vector.extract_strided_slice %54 {offsets = [0, 256], sizes = [8, 128], strides = [1, 1]} : vector<8x512xf32> to vector<8x128xf32>
    %68 = math.tanh %67 : vector<8x128xf32>
    %69 = vector.extract_strided_slice %54 {offsets = [0, 384], sizes = [8, 128], strides = [1, 1]} : vector<8x512xf32> to vector<8x128xf32>
    %70 = arith.negf %69 : vector<8x128xf32>
    %71 = math.exp %70 : vector<8x128xf32>
    %cst_26 = arith.constant 1.000000e+00 : f32
    %72 = vector.broadcast %cst_26 : f32 to vector<8x128xf32>
    %73 = arith.addf %72, %71 : vector<8x128xf32>
    %74 = arith.divf %72, %73 : vector<8x128xf32>
    %75 = arith.mulf %66, %48 : vector<8x128xf32>
    %76 = arith.mulf %60, %68 : vector<8x128xf32>
    %77 = arith.addf %75, %76 : vector<8x128xf32>
    %78 = math.tanh %77 : vector<8x128xf32>
    %79 = arith.mulf %74, %78 : vector<8x128xf32>
    %80 = vector.extract_strided_slice %18 {offsets = [16, 0], sizes = [8, 512], strides = [1, 1]} : vector<40x512xf32> to vector<8x512xf32>
    %81 = arith.truncf %79 : vector<8x128xf32> to vector<8x128xbf16>
    %cst_27 = arith.constant dense<0.000000e+00> : vector<8x512xf32>
    %82 = tpu.matmul %81, %19, %cst_27 {dimension_numbers = #tpu.dot_dimension_numbers<[1], [0], [0], [1], [0, 0, 1, 1], [], []>} : vector<8x128xbf16>, vector<128x512xbf16>, vector<8x512xf32> -> vector<8x512xf32>
    %83 = arith.addf %80, %82 : vector<8x512xf32>
    %84 = vector.extract_strided_slice %83 {offsets = [0, 0], sizes = [8, 128], strides = [1, 1]} : vector<8x512xf32> to vector<8x128xf32>
    %85 = arith.negf %84 : vector<8x128xf32>
    %86 = math.exp %85 : vector<8x128xf32>
    %cst_28 = arith.constant 1.000000e+00 : f32
    %87 = vector.broadcast %cst_28 : f32 to vector<8x128xf32>
    %88 = arith.addf %87, %86 : vector<8x128xf32>
    %89 = arith.divf %87, %88 : vector<8x128xf32>
    %90 = vector.extract_strided_slice %83 {offsets = [0, 128], sizes = [8, 128], strides = [1, 1]} : vector<8x512xf32> to vector<8x128xf32>
    %91 = arith.negf %90 : vector<8x128xf32>
    %92 = math.exp %91 : vector<8x128xf32>
    %cst_29 = arith.constant 1.000000e+00 : f32
    %93 = vector.broadcast %cst_29 : f32 to vector<8x128xf32>
    %94 = arith.addf %93, %92 : vector<8x128xf32>
    %95 = arith.divf %93, %94 : vector<8x128xf32>
    %96 = vector.extract_strided_slice %83 {offsets = [0, 256], sizes = [8, 128], strides = [1, 1]} : vector<8x512xf32> to vector<8x128xf32>
    %97 = math.tanh %96 : vector<8x128xf32>
    %98 = vector.extract_strided_slice %83 {offsets = [0, 384], sizes = [8, 128], strides = [1, 1]} : vector<8x512xf32> to vector<8x128xf32>
    %99 = arith.negf %98 : vector<8x128xf32>
    %100 = math.exp %99 : vector<8x128xf32>
    %cst_30 = arith.constant 1.000000e+00 : f32
    %101 = vector.broadcast %cst_30 : f32 to vector<8x128xf32>
    %102 = arith.addf %101, %100 : vector<8x128xf32>
    %103 = arith.divf %101, %102 : vector<8x128xf32>
    %104 = arith.mulf %95, %77 : vector<8x128xf32>
    %105 = arith.mulf %89, %97 : vector<8x128xf32>
    %106 = arith.addf %104, %105 : vector<8x128xf32>
    %107 = math.tanh %106 : vector<8x128xf32>
    %108 = arith.mulf %103, %107 : vector<8x128xf32>
    %109 = vector.extract_strided_slice %18 {offsets = [24, 0], sizes = [8, 512], strides = [1, 1]} : vector<40x512xf32> to vector<8x512xf32>
    %110 = arith.truncf %108 : vector<8x128xf32> to vector<8x128xbf16>
    %cst_31 = arith.constant dense<0.000000e+00> : vector<8x512xf32>
    %111 = tpu.matmul %110, %19, %cst_31 {dimension_numbers = #tpu.dot_dimension_numbers<[1], [0], [0], [1], [0, 0, 1, 1], [], []>} : vector<8x128xbf16>, vector<128x512xbf16>, vector<8x512xf32> -> vector<8x512xf32>
    %112 = arith.addf %109, %111 : vector<8x512xf32>
    %113 = vector.extract_strided_slice %112 {offsets = [0, 0], sizes = [8, 128], strides = [1, 1]} : vector<8x512xf32> to vector<8x128xf32>
    %114 = arith.negf %113 : vector<8x128xf32>
    %115 = math.exp %114 : vector<8x128xf32>
    %cst_32 = arith.constant 1.000000e+00 : f32
    %116 = vector.broadcast %cst_32 : f32 to vector<8x128xf32>
    %117 = arith.addf %116, %115 : vector<8x128xf32>
    %118 = arith.divf %116, %117 : vector<8x128xf32>
    %119 = vector.extract_strided_slice %112 {offsets = [0, 128], sizes = [8, 128], strides = [1, 1]} : vector<8x512xf32> to vector<8x128xf32>
    %120 = arith.negf %119 : vector<8x128xf32>
    %121 = math.exp %120 : vector<8x128xf32>
    %cst_33 = arith.constant 1.000000e+00 : f32
    %122 = vector.broadcast %cst_33 : f32 to vector<8x128xf32>
    %123 = arith.addf %122, %121 : vector<8x128xf32>
    %124 = arith.divf %122, %123 : vector<8x128xf32>
    %125 = vector.extract_strided_slice %112 {offsets = [0, 256], sizes = [8, 128], strides = [1, 1]} : vector<8x512xf32> to vector<8x128xf32>
    %126 = math.tanh %125 : vector<8x128xf32>
    %127 = vector.extract_strided_slice %112 {offsets = [0, 384], sizes = [8, 128], strides = [1, 1]} : vector<8x512xf32> to vector<8x128xf32>
    %128 = arith.negf %127 : vector<8x128xf32>
    %129 = math.exp %128 : vector<8x128xf32>
    %cst_34 = arith.constant 1.000000e+00 : f32
    %130 = vector.broadcast %cst_34 : f32 to vector<8x128xf32>
    %131 = arith.addf %130, %129 : vector<8x128xf32>
    %132 = arith.divf %130, %131 : vector<8x128xf32>
    %133 = arith.mulf %124, %106 : vector<8x128xf32>
    %134 = arith.mulf %118, %126 : vector<8x128xf32>
    %135 = arith.addf %133, %134 : vector<8x128xf32>
    %136 = math.tanh %135 : vector<8x128xf32>
    %137 = arith.mulf %132, %136 : vector<8x128xf32>
    %138 = vector.extract_strided_slice %18 {offsets = [32, 0], sizes = [8, 512], strides = [1, 1]} : vector<40x512xf32> to vector<8x512xf32>
    %139 = arith.truncf %137 : vector<8x128xf32> to vector<8x128xbf16>
    %cst_35 = arith.constant dense<0.000000e+00> : vector<8x512xf32>
    %140 = tpu.matmul %139, %19, %cst_35 {dimension_numbers = #tpu.dot_dimension_numbers<[1], [0], [0], [1], [0, 0, 1, 1], [], []>} : vector<8x128xbf16>, vector<128x512xbf16>, vector<8x512xf32> -> vector<8x512xf32>
    %141 = arith.addf %138, %140 : vector<8x512xf32>
    %142 = vector.extract_strided_slice %141 {offsets = [0, 0], sizes = [8, 128], strides = [1, 1]} : vector<8x512xf32> to vector<8x128xf32>
    %143 = arith.negf %142 : vector<8x128xf32>
    %144 = math.exp %143 : vector<8x128xf32>
    %cst_36 = arith.constant 1.000000e+00 : f32
    %145 = vector.broadcast %cst_36 : f32 to vector<8x128xf32>
    %146 = arith.addf %145, %144 : vector<8x128xf32>
    %147 = arith.divf %145, %146 : vector<8x128xf32>
    %148 = vector.extract_strided_slice %141 {offsets = [0, 128], sizes = [8, 128], strides = [1, 1]} : vector<8x512xf32> to vector<8x128xf32>
    %149 = arith.negf %148 : vector<8x128xf32>
    %150 = math.exp %149 : vector<8x128xf32>
    %cst_37 = arith.constant 1.000000e+00 : f32
    %151 = vector.broadcast %cst_37 : f32 to vector<8x128xf32>
    %152 = arith.addf %151, %150 : vector<8x128xf32>
    %153 = arith.divf %151, %152 : vector<8x128xf32>
    %154 = vector.extract_strided_slice %141 {offsets = [0, 256], sizes = [8, 128], strides = [1, 1]} : vector<8x512xf32> to vector<8x128xf32>
    %155 = math.tanh %154 : vector<8x128xf32>
    %156 = vector.extract_strided_slice %141 {offsets = [0, 384], sizes = [8, 128], strides = [1, 1]} : vector<8x512xf32> to vector<8x128xf32>
    %157 = arith.negf %156 : vector<8x128xf32>
    %158 = math.exp %157 : vector<8x128xf32>
    %cst_38 = arith.constant 1.000000e+00 : f32
    %159 = vector.broadcast %cst_38 : f32 to vector<8x128xf32>
    %160 = arith.addf %159, %158 : vector<8x128xf32>
    %161 = arith.divf %159, %160 : vector<8x128xf32>
    %162 = arith.mulf %153, %135 : vector<8x128xf32>
    %163 = arith.mulf %147, %155 : vector<8x128xf32>
    %164 = arith.addf %162, %163 : vector<8x128xf32>
    %165 = math.tanh %164 : vector<8x128xf32>
    %166 = arith.mulf %161, %165 : vector<8x128xf32>
    %167 = tpu.concatenate %50, %79, %108, %137, %166 in 0 : vector<8x128xf32>, vector<8x128xf32>, vector<8x128xf32>, vector<8x128xf32>, vector<8x128xf32> -> vector<40x128xf32>
    %c0_i32_39 = arith.constant 0 : i32
    %168 = tpu.memref_slice %arg13[%c0_i32_39] : memref<1x!tpu.dma_semaphore, #tpu.memory_space<semaphore_mem>> -> memref<1x!tpu.dma_semaphore, #tpu.memory_space<semaphore_mem>>
    %169 = tpu.memref_squeeze %168 : memref<1x!tpu.dma_semaphore, #tpu.memory_space<semaphore_mem>> -> memref<!tpu.dma_semaphore, #tpu.memory_space<semaphore_mem>>
    tpu.wait_dma2 semaphore(%169 : memref<!tpu.dma_semaphore, #tpu.memory_space<semaphore_mem>>) src(%arg9 : memref<128x256xbf16, #tpu.memory_space<any>>) dst(%arg12 : memref<128x256xbf16, #tpu.memory_space<vmem>>)
    %170 = arith.truncf %167 : vector<40x128xf32> to vector<40x128xbf16>
    %c0_40 = arith.constant 0 : index
    %c0_41 = arith.constant 0 : index
    %171 = vector.load %arg12[%c0_40, %c0_41] : memref<128x256xbf16, #tpu.memory_space<vmem>>, vector<128x256xbf16>
    %cst_42 = arith.constant dense<0.000000e+00> : vector<40x256xf32>
    %172 = tpu.matmul %170, %171, %cst_42 {dimension_numbers = #tpu.dot_dimension_numbers<[1], [0], [0], [1], [0, 0, 1, 1], [], []>} : vector<40x128xbf16>, vector<128x256xbf16>, vector<40x256xf32> -> vector<40x256xf32>
    %c0_43 = arith.constant 0 : index
    %c0_44 = arith.constant 0 : index
    %173 = vector.load %arg10[%c0_43, %c0_44] : memref<1x256xf32, #tpu.memory_space<vmem>>, vector<1x256xf32>
    %174 = vector.broadcast %173 : vector<1x256xf32> to vector<40x256xf32>
    %175 = arith.addf %172, %174 : vector<40x256xf32>
    %cst_45 = arith.constant dense<0xFF800000> : vector<40xf32>
    %176 = vector.multi_reduction <maximumf>, %175, %cst_45 [1] : vector<40x256xf32> to vector<40xf32>
    %177 = vector.shape_cast %176 : vector<40xf32> to vector<40x1xf32>
    %178 = vector.broadcast %177 : vector<40x1xf32> to vector<40x256xf32>
    %179 = arith.subf %175, %178 : vector<40x256xf32>
    %180 = math.exp %179 : vector<40x256xf32>
    %cst_46 = arith.constant dense<0.000000e+00> : vector<40xf32>
    %181 = vector.multi_reduction <add>, %180, %cst_46 [1] : vector<40x256xf32> to vector<40xf32>
    %182 = vector.shape_cast %181 : vector<40xf32> to vector<40x1xf32>
    %183 = math.log %182 : vector<40x1xf32>
    %184 = arith.addf %177, %183 : vector<40x1xf32>
    %185 = vector.broadcast %184 : vector<40x1xf32> to vector<40x256xf32>
    %186 = arith.subf %175, %185 : vector<40x256xf32>
    %c0_47 = arith.constant 0 : index
    %c0_48 = arith.constant 0 : index
    %187 = vector.load %arg11[%c0_47, %c0_48] : memref<40x256xf32, #tpu.memory_space<vmem>>, vector<40x256xf32>
    tpu.vector_store %arg11[%c0_47, %c0_48], %186 {strides = array<i32>} : memref<40x256xf32, #tpu.memory_space<vmem>>, vector<40x256xf32>,
    return
  }
  func.func @transform_0(%arg0: i32) -> (i32, i32) {
    %c0_i32 = arith.constant 0 : i32
    %c0_i32_0 = arith.constant 0 : i32
    %c0_i32_1 = arith.constant 0 : i32
    return %c0_i32, %c0_i32_0 : i32, i32
  }
  func.func @transform_1(%arg0: i32) -> (i32, i32) {
    %c0_i32 = arith.constant 0 : i32
    %c0_i32_0 = arith.constant 0 : i32
    %c0_i32_1 = arith.constant 0 : i32
    return %c0_i32, %c0_i32_0 : i32, i32
  }
  func.func @transform_2(%arg0: i32) -> (i32, i32) {
    %c0_i32 = arith.constant 0 : i32
    %c0_i32_0 = arith.constant 0 : i32
    %c0_i32_1 = arith.constant 0 : i32
    return %c0_i32, %c0_i32_0 : i32, i32
  }
  func.func @transform_3(%arg0: i32) -> (i32, i32) {
    %c0_i32 = arith.constant 0 : i32
    %c0_i32_0 = arith.constant 0 : i32
    %c0_i32_1 = arith.constant 0 : i32
    return %c0_i32, %c0_i32_0 : i32, i32
  }
  func.func @transform_4(%arg0: i32) -> (i32, i32) {
    %c0_i32 = arith.constant 0 : i32
    %c0_i32_0 = arith.constant 0 : i32
    %c0_i32_1 = arith.constant 0 : i32
    return %c0_i32, %c0_i32_0 : i32, i32
  }
  func.func @transform_5(%arg0: i32) -> (i32, i32) {
    %c0_i32 = arith.constant 0 : i32
    %c0_i32_0 = arith.constant 0 : i32
    %c0_i32_1 = arith.constant 0 : i32
    return %c0_i32, %c0_i32_0 : i32, i32
  }
  func.func @transform_6(%arg0: i32) -> (i32, i32) {
    %c0_i32 = arith.constant 0 : i32
    %c0_i32_0 = arith.constant 0 : i32
    %c0_i32_1 = arith.constant 0 : i32
    return %c0_i32, %c0_i32_0 : i32, i32
  }
  func.func @transform_7(%arg0: i32) -> (i32, i32) {
    %c0_i32 = arith.constant 0 : i32
    %c0_i32_0 = arith.constant 0 : i32
    %c0_i32_1 = arith.constant 0 : i32
    return %c0_i32, %c0_i32_0 : i32, i32
  }
  func.func @transform_9(%arg0: i32) -> (i32, i32) {
    %c0_i32 = arith.constant 0 : i32
    %c0_i32_0 = arith.constant 0 : i32
    %c0_i32_1 = arith.constant 0 : i32
    return %c0_i32, %c0_i32_0 : i32, i32
  }
  func.func @transform_10(%arg0: i32) -> (i32, i32) {
    %c0_i32 = arith.constant 0 : i32
    %c0_i32_0 = arith.constant 0 : i32
    %c0_i32_1 = arith.constant 0 : i32
    return %c0_i32, %c0_i32_0 : i32, i32
  }
}

</mosaic_0001>

<llo_original>
// kernel: tpu_custom_call.1
$region0: #{tpu_custom_call.1}
  #allocation0 [shape = 'u32[]', space=smem, size = 0x4, offset = 0x4, fixed_abs, tag = 'smem constant byte address 0x4 - core index']
  #allocation1 [shape = 'u32[144,128]{1,0:T(1,128)}', space=vmem, size = 0x12000, scoped, tag = 'internal scratch']
  #allocation2 [shape = 'bf16[128,256]{1,0:T(16,128)(2,1)}', space=vmem, size = 0x10000, scoped, tag = 'scratch operand']
  #allocation3 [shape = 's32[1]{0}', space=sflag, size = 0x4, scoped, tag = 'scratch operand']
  #allocation16 [shape = 's32[]', space=sflag, size = 0x4, offset = 0, fixed_abs, tag = 'sflag constant byte address 0x0 - dummy sync flag']
  %s0 = inlined_call_operand.hbm [shape: bf16[8,256], index: 0, kind: input, shape index: {}]
  %s1 = inlined_call_operand.hbm [shape: bf16[40,128], index: 1, kind: input, shape index: {}]
  %s2 = inlined_call_operand.hbm [shape: bf16[256,128], index: 2, kind: input, shape index: {}]
  %s3 = inlined_call_operand.vmem [shape: f32[1,128], index: 3, kind: input, shape index: {}]
  %s4 = inlined_call_operand.hbm [shape: bf16[128,512], index: 4, kind: input, shape index: {}]
  %s5 = inlined_call_operand.hbm [shape: bf16[128,512], index: 5, kind: input, shape index: {}]
  %s6 = inlined_call_operand.vmem [shape: f32[1,512], index: 6, kind: input, shape index: {}]
  %s7 = inlined_call_operand.hbm [shape: bf16[128,512], index: 7, kind: input, shape index: {}]
  %s8 = inlined_call_operand.hbm [shape: bf16[128,256], index: 8, kind: input, shape index: {}]
  %s9 = inlined_call_operand.vmem [shape: f32[1,256], index: 9, kind: input, shape index: {}]
  %s10 = inlined_call_operand.hbm [shape: f32[40,256], index: 10, kind: output, shape index: {}]
  %s11 = sld [smem:[#allocation0]]
  $region70: #{tpu_custom_call.1} parent=0
    _
  %s13 = ssub.s32 1, %s11
  %s14 = scalar_select 0, %s13, %s11
  $region1: #{tpu_custom_call.1} parent=0
    #allocation4 [shape = 'u8[4096]{0}', space=vmem, size = 0x1000, scoped, tag = 'input window, operand 0, single buffered']
    #allocation5 [shape = 's32[1]{0}', space=sflag, size = 0x4, scoped, tag = 'scoped memory for tpu_custom_call.1']
    #allocation6 [shape = 's32[1]{0}', space=sflag, size = 0x4, scoped, tag = 'scoped memory for tpu_custom_call.1']
    #allocation7 [shape = 'u8[10240]{0}', space=vmem, size = 0x2800, scoped, tag = 'input window, operand 1, single buffered']
    #allocation8 [shape = 's32[1]{0}', space=sflag, size = 0x4, scoped, tag = 'scoped memory for tpu_custom_call.1']
    #allocation9 [shape = 'u8[65536]{0}', space=vmem, size = 0x10000, scoped, tag = 'input window, operand 2, single buffered']
    #allocation10 [shape = 'u8[131072]{0}', space=vmem, size = 0x20000, scoped, tag = 'input window, operand 4, single buffered']
    #allocation11 [shape = 's32[1]{0}', space=sflag, size = 0x4, scoped, tag = 'scoped memory for tpu_custom_call.1']
    #allocation12 [shape = 'u8[131072]{0}', space=vmem, size = 0x20000, scoped, tag = 'input window, operand 5, single buffered']
    #allocation13 [shape = 'u8[131072]{0}', space=vmem, size = 0x20000, scoped, tag = 'input window, operand 7, single buffered']
    #allocation14 [shape = 's32[1]{0}', space=sflag, size = 0x4, scoped, tag = 'scoped memory for tpu_custom_call.1']
    #allocation15 [shape = 'u8[40960]{0}', space=vmem, size = 0xa000, scoped, tag = 'output window, operand 0, single buffered']
    #allocation17 [shape = 'u32[9]{0}', space=smem, size = 0x24, scoped, tag = 'DMA stride descriptor']
    %15 = vsyncpa [#allocation5], 0
    %16 = vsyncpa [#allocation8], 0
    %17 = vsyncpa [#allocation11], 0
    %18 = vsyncpa [#allocation14], 0
    %19 = vsyncpa [#allocation6], 0
    // Predicated region
    $region2: #{tpu_custom_call.1} parent=1 // pred_check
      _
    $region3: #{tpu_custom_call.1} parent=1 // pred_check_branch
      %21 = sbr.rel (0) target = $region5
    $region4: #{tpu_custom_call.1} parent=1 // pred_region
      %s23 = ssub.s32 128, 128
      %24 = vsyncadd [#allocation5], %s23
      %s26 = sshll.u32 [#allocation4], 4
      %s27 = int_to_ptr.vmem [resolvable:$true] %s26
      %29 = dma.hbm_to_vmem [thread:$0]  %s0, 128, %s27, [#allocation5]
    $region5: #{tpu_custom_call.1} parent=1 // pred_fallthru
      _
    // Predicated region
    $region6: #{tpu_custom_call.1} parent=1 // pred_check
      _
    $region7: #{tpu_custom_call.1} parent=1 // pred_check_branch
      %31 = sbr.rel (0) target = $region9
    $region8: #{tpu_custom_call.1} parent=1 // pred_region
      %s33 = ssub.s32 320, 320
      %34 = vsyncadd [#allocation8], %s33
      %s35 = sshll.u32 [#allocation7], 4
      %s36 = int_to_ptr.vmem [resolvable:$true] %s35
      %41 = dma.hbm_to_vmem [thread:$0]  %s1, 320, %s36, [#allocation8], 64, 64, 4
    $region9: #{tpu_custom_call.1} parent=1 // pred_fallthru
      _
    // Predicated region
    $region10: #{tpu_custom_call.1} parent=1 // pred_check
      _
    $region11: #{tpu_custom_call.1} parent=1 // pred_check_branch
      %43 = sbr.rel (0) target = $region13
    $region12: #{tpu_custom_call.1} parent=1 // pred_region
      %s45 = ssub.s32 2048, 2048
      %46 = vsyncadd [#allocation8], %s45
      %s47 = sshll.u32 [#allocation9], 4
      %s48 = int_to_ptr.vmem [resolvable:$true] %s47
      %53 = dma.hbm_to_vmem [thread:$0]  %s2, 2048, %s48, [#allocation8], 64, 64, 4
    $region13: #{tpu_custom_call.1} parent=1 // pred_fallthru
      _
    // Predicated region
    $region14: #{tpu_custom_call.1} parent=1 // pred_check
      _
    $region15: #{tpu_custom_call.1} parent=1 // pred_check_branch
      %55 = sbr.rel (0) target = $region17
    $region16: #{tpu_custom_call.1} parent=1 // pred_region
      _
    $region17: #{tpu_custom_call.1} parent=1 // pred_fallthru
      _
    // Predicated region
    $region18: #{tpu_custom_call.1} parent=1 // pred_check
      _
    $region19: #{tpu_custom_call.1} parent=1 // pred_check_branch
      %57 = sbr.rel (0) target = $region21
    $region20: #{tpu_custom_call.1} parent=1 // pred_region
      %s59 = ssub.s32 4096, 4096
      %60 = vsyncadd [#allocation11], %s59
      %s61 = sshll.u32 [#allocation10], 4
      %s62 = int_to_ptr.vmem [resolvable:$true] %s61
      %67 = dma.hbm_to_vmem [thread:$0]  %s4, 4096, %s62, [#allocation11], 256, 256, 16
    $region21: #{tpu_custom_call.1} parent=1 // pred_fallthru
      _
    // Predicated region
    $region22: #{tpu_custom_call.1} parent=1 // pred_check
      _
    $region23: #{tpu_custom_call.1} parent=1 // pred_check_branch
      %69 = sbr.rel (0) target = $region25
    $region24: #{tpu_custom_call.1} parent=1 // pred_region
      %s71 = ssub.s32 4096, 4096
      %72 = vsyncadd [#allocation11], %s71
      %s73 = sshll.u32 [#allocation12], 4
      %s74 = int_to_ptr.vmem [resolvable:$true] %s73
      %79 = dma.hbm_to_vmem [thread:$0]  %s5, 4096, %s74, [#allocation11], 256, 256, 16
    $region25: #{tpu_custom_call.1} parent=1 // pred_fallthru
      _
    // Predicated region
    $region26: #{tpu_custom_call.1} parent=1 // pred_check
      _
    $region27: #{tpu_custom_call.1} parent=1 // pred_check_branch
      %81 = sbr.rel (0) target = $region29
    $region28: #{tpu_custom_call.1} parent=1 // pred_region
      _
    $region29: #{tpu_custom_call.1} parent=1 // pred_fallthru
      _
    // Predicated region
    $region30: #{tpu_custom_call.1} parent=1 // pred_check
      _
    $region31: #{tpu_custom_call.1} parent=1 // pred_check_branch
      %83 = sbr.rel (0) target = $region33
    $region32: #{tpu_custom_call.1} parent=1 // pred_region
      %s85 = ssub.s32 4096, 4096
      %86 = vsyncadd [#allocation14], %s85
      %s87 = sshll.u32 [#allocation13], 4
      %s88 = int_to_ptr.vmem [resolvable:$true] %s87
      %93 = dma.hbm_to_vmem [thread:$0]  %s7, 4096, %s88, [#allocation14], 256, 256, 16
    $region33: #{tpu_custom_call.1} parent=1 // pred_fallthru
      _
    // Predicated region
    $region34: #{tpu_custom_call.1} parent=1 // pred_check
      _
    $region35: #{tpu_custom_call.1} parent=1 // pred_check_branch
      %95 = sbr.rel (0) target = $region37
    $region36: #{tpu_custom_call.1} parent=1 // pred_region
      _
    $region37: #{tpu_custom_call.1} parent=1 // pred_fallthru
      _
    // Predicated region
    $region38: #{tpu_custom_call.1} parent=1 // pred_check
      _
    $region39: #{tpu_custom_call.1} parent=1 // pred_check_branch
      %97 = sbr.rel (0) target = $region41
    $region40: #{tpu_custom_call.1} parent=1 // pred_region
      %98 = dma.done [#allocation5], 128
    $region41: #{tpu_custom_call.1} parent=1 // pred_fallthru
      _
    // Predicated region
    $region42: #{tpu_custom_call.1} parent=1 // pred_check
      _
    $region43: #{tpu_custom_call.1} parent=1 // pred_check_branch
      %100 = sbr.rel (0) target = $region45
    $region44: #{tpu_custom_call.1} parent=1 // pred_region
      %101 = dma.done [#allocation8], 320
    $region45: #{tpu_custom_call.1} parent=1 // pred_fallthru
      _
    // Predicated region
    $region46: #{tpu_custom_call.1} parent=1 // pred_check
      _
    $region47: #{tpu_custom_call.1} parent=1 // pred_check_branch
      %103 = sbr.rel (0) target = $region49
    $region48: #{tpu_custom_call.1} parent=1 // pred_region
      %104 = dma.done [#allocation8], 2048
    $region49: #{tpu_custom_call.1} parent=1 // pred_fallthru
      _
    // Predicated region
    $region50: #{tpu_custom_call.1} parent=1 // pred_check
      _
    $region51: #{tpu_custom_call.1} parent=1 // pred_check_branch
      %106 = sbr.rel (0) target = $region53
    $region52: #{tpu_custom_call.1} parent=1 // pred_region
      %107 = dma.done [#allocation11], 4096
    $region53: #{tpu_custom_call.1} parent=1 // pred_fallthru
      _
    // Predicated region
    $region54: #{tpu_custom_call.1} parent=1 // pred_check
      _
    $region55: #{tpu_custom_call.1} parent=1 // pred_check_branch
      %109 = sbr.rel (0) target = $region57
    $region56: #{tpu_custom_call.1} parent=1 // pred_region
      %110 = dma.done [#allocation11], 4096
    $region57: #{tpu_custom_call.1} parent=1 // pred_fallthru
      _
    // Predicated region
    $region58: #{tpu_custom_call.1} parent=1 // pred_check
      _
    $region59: #{tpu_custom_call.1} parent=1 // pred_check_branch
      %112 = sbr.rel (0) target = $region61
    $region60: #{tpu_custom_call.1} parent=1 // pred_region
      %113 = dma.done [#allocation14], 4096
    $region61: #{tpu_custom_call.1} parent=1 // pred_fallthru
      _
    %s116 = sshll.u32 1, 14
    %s117 = sxor.u32 4294967295, %s116
    %s119 = sld [smem:[#allocation0]]
    %s120 = sadd.s32 2, %s119
    %s122 = sshll.u32 7, 26
    %s123 = sxor.u32 4294967295, %s122
    %s124 = sand.u32 0, %s123
    %s125 = sshll.u32 %s120, 26
    %s126 = sor.u32 %s124, %s125
    %s127 = sshll.u32 [#allocation2], 4
    %s128 = int_to_ptr.vmem [resolvable:$true] %s127
    %131 = sst [smem:[#allocation17]] 256
    %s132 = scalar_lea.smem [#allocation17], 1
    %133 = sst [smem:[%s132]] 256
    %s134 = scalar_lea.smem [#allocation17], 2
    %135 = sst [smem:[%s134]] 2
    %s136 = scalar_lea.smem [#allocation17], 3
    %137 = sst [smem:[%s136]] 64
    %s138 = scalar_lea.smem [#allocation17], 4
    %139 = sst [smem:[%s138]] 128
    %s140 = scalar_lea.smem [#allocation17], 5
    %141 = sst [smem:[%s140]] 2
    %s142 = scalar_lea.smem [#allocation17], 6
    %143 = sst [smem:[%s142]] 128
    %s144 = scalar_lea.smem [#allocation17], 7
    %145 = sst [smem:[%s144]] 64
    %s146 = scalar_lea.smem [#allocation17], 8
    %147 = sst [smem:[%s146]] 4
    %149 = dma.general %s8, 2048, %s128, [#allocation3], [#allocation16], [#allocation17], %s126, 0
    %v150 = vld [vmem:[#allocation4] sm:$0xff]
    %v151 = vld [vmem:[#allocation9] sm:$0xf]
    %v152 = vld [vmem:[#allocation9 + $0x4] sm:$0xf]
    %v153 = vld [vmem:[#allocation9 + $0x8] sm:$0xf]
    %v154 = vld [vmem:[#allocation9 + $0xc] sm:$0xf]
    %v155 = vld [vmem:[#allocation9 + $0x10] sm:$0xf]
    %v156 = vld [vmem:[#allocation9 + $0x14] sm:$0xf]
    %v157 = vld [vmem:[#allocation9 + $0x18] sm:$0xf]
    %v158 = vld [vmem:[#allocation9 + $0x1c] sm:$0xf]
    %v159 = vld [vmem:[#allocation9 + $0x20] sm:$0xf]
    %v160 = vld [vmem:[#allocation9 + $0x24] sm:$0xf]
    %v161 = vld [vmem:[#allocation9 + $0x28] sm:$0xf]
    %v162 = vld [vmem:[#allocation9 + $0x2c] sm:$0xf]
    %v163 = vld [vmem:[#allocation9 + $0x30] sm:$0xf]
    %v164 = vld [vmem:[#allocation9 + $0x34] sm:$0xf]
    %v165 = vld [vmem:[#allocation9 + $0x38] sm:$0xf]
    %v166 = vld [vmem:[#allocation9 + $0x3c] sm:$0xf]
    %v167 = vld [vmem:[#allocation9 + $0x40] sm:$0xf]
    %v168 = vld [vmem:[#allocation9 + $0x44] sm:$0xf]
    %v169 = vld [vmem:[#allocation9 + $0x48] sm:$0xf]
    %v170 = vld [vmem:[#allocation9 + $0x4c] sm:$0xf]
    %v171 = vld [vmem:[#allocation9 + $0x50] sm:$0xf]
    %v172 = vld [vmem:[#allocation9 + $0x54] sm:$0xf]
    %v173 = vld [vmem:[#allocation9 + $0x58] sm:$0xf]
    %v174 = vld [vmem:[#allocation9 + $0x5c] sm:$0xf]
    %v175 = vld [vmem:[#allocation9 + $0x60] sm:$0xf]
    %v176 = vld [vmem:[#allocation9 + $0x64] sm:$0xf]
    %v177 = vld [vmem:[#allocation9 + $0x68] sm:$0xf]
    %v178 = vld [vmem:[#allocation9 + $0x6c] sm:$0xf]
    %v179 = vld [vmem:[#allocation9 + $0x70] sm:$0xf]
    %v180 = vld [vmem:[#allocation9 + $0x74] sm:$0xf]
    %v181 = vld [vmem:[#allocation9 + $0x78] sm:$0xf]
    %v182 = vld [vmem:[#allocation9 + $0x7c] sm:$0xf]
    %v183 = vld [vmem:[%s3] sm:$0x1]
    %v185 = vlaneseq
    %v186 = vshrl.u32 %v185, 7
    %v187 = vsub.s32 0, %v186
    %v188 = vrot.slane %v183, %v187
    %v191 = vunpack.c.l.b16 %v150
    %v192 = vunpack.c.h.b16 %v150
    %v193 = vpack.c.b16 %v191, %v191
    %v194 = vpack.c.b16 %v192, %v192
    %v229 = vunpack.c.l.b16 %v151
    %v230 = vunpack.c.l.b16 %v152
    %v231 = vunpack.c.l.b16 %v153
    %v232 = vunpack.c.l.b16 %v154
    %v233 = vunpack.c.l.b16 %v155
    %v234 = vunpack.c.l.b16 %v156
    %v235 = vunpack.c.l.b16 %v157
    %v236 = vunpack.c.l.b16 %v158
    %v237 = vunpack.c.l.b16 %v159
    %v238 = vunpack.c.l.b16 %v160
    %v239 = vunpack.c.l.b16 %v161
    %v240 = vunpack.c.l.b16 %v162
    %v241 = vunpack.c.l.b16 %v163
    %v242 = vunpack.c.l.b16 %v164
    %v243 = vunpack.c.l.b16 %v165
    %v244 = vunpack.c.l.b16 %v166
    %v245 = vunpack.c.l.b16 %v167
    %v246 = vunpack.c.l.b16 %v168
    %v247 = vunpack.c.l.b16 %v169
    %v248 = vunpack.c.l.b16 %v170
    %v249 = vunpack.c.l.b16 %v171
    %v250 = vunpack.c.l.b16 %v172
    %v251 = vunpack.c.l.b16 %v173
    %v252 = vunpack.c.l.b16 %v174
    %v253 = vunpack.c.l.b16 %v175
    %v254 = vunpack.c.l.b16 %v176
    %v255 = vunpack.c.l.b16 %v177
    %v256 = vunpack.c.l.b16 %v178
    %v257 = vunpack.c.l.b16 %v179
    %v258 = vunpack.c.l.b16 %v180
    %v259 = vunpack.c.l.b16 %v181
    %v260 = vunpack.c.l.b16 %v182
    %v261 = vpack.c.b16 %v230, %v229
    %v262 = vpack.c.b16 %v232, %v231
    %v263 = vpack.c.b16 %v234, %v233
    %v264 = vpack.c.b16 %v236, %v235
    %v265 = vpack.c.b16 %v238, %v237
    %v266 = vpack.c.b16 %v240, %v239
    %v267 = vpack.c.b16 %v242, %v241
    %v268 = vpack.c.b16 %v244, %v243
    %v269 = vpack.c.b16 %v246, %v245
    %v270 = vpack.c.b16 %v248, %v247
    %v271 = vpack.c.b16 %v250, %v249
    %v272 = vpack.c.b16 %v252, %v251
    %v273 = vpack.c.b16 %v254, %v253
    %v274 = vpack.c.b16 %v256, %v255
    %v275 = vpack.c.b16 %v258, %v257
    %v276 = vpack.c.b16 %v260, %v259
    %293 = vmatprep.subr.bf16.mxu0 0
    %294 = vmatpush1.bf16.msra.mxu0 %v261
    %295 = vmatprep.subr.bf16.mxu0 0
    %296 = vmatpush1.bf16.msra.mxu0 %v262
    %297 = vmatprep.subr.bf16.mxu0 0
    %298 = vmatpush1.bf16.msra.mxu0 %v263
    %299 = vmatprep.subr.bf16.mxu0 0
    %300 = vmatpush1.bf16.msra.mxu0 %v264
    %301 = vmatprep.subr.bf16.mxu0 0
    %302 = vmatpush1.bf16.msra.mxu0 %v265
    %303 = vmatprep.subr.bf16.mxu0 0
    %304 = vmatpush1.bf16.msra.mxu0 %v266
    %305 = vmatprep.subr.bf16.mxu0 0
    %306 = vmatpush1.bf16.msra.mxu0 %v267
    %307 = vmatprep.subr.bf16.mxu0 0
    %308 = vmatpush1.bf16.msra.mxu0 %v268
    %309 = vmatprep.subr.bf16.mxu0 0
    %310 = vmatpush1.bf16.msra.mxu0 %v269
    %311 = vmatprep.subr.bf16.mxu0 0
    %312 = vmatpush1.bf16.msra.mxu0 %v270
    %313 = vmatprep.subr.bf16.mxu0 0
    %314 = vmatpush1.bf16.msra.mxu0 %v271
    %315 = vmatprep.subr.bf16.mxu0 0
    %316 = vmatpush1.bf16.msra.mxu0 %v272
    %317 = vmatprep.subr.bf16.mxu0 0
    %318 = vmatpush1.bf16.msra.mxu0 %v273
    %319 = vmatprep.subr.bf16.mxu0 0
    %320 = vmatpush1.bf16.msra.mxu0 %v274
    %321 = vmatprep.subr.bf16.mxu0 0
    %322 = vmatpush1.bf16.msra.mxu0 %v275
    %323 = vmatprep.subr.bf16.mxu0 0
    %324 = vmatpush1.bf16.msra.mxu0 %v276
    %325 = vmatprep.mubr.bf16.mxu0 %v194
    %326 = vmatmul.mubr.bf16.gmra.mrb[0].mxu0 %v193
    %v327 = vpop.f32.mrb[0].mxu0
    %v328 = vadd.f32 %v188, %v327
    %v329 = vpop.f32.mrb[0].mxu0
    %v330 = vpop.f32.mrb[0].mxu0
    %v331 = vpop.f32.mrb[0].mxu0
    %332 = vdwg.mxu0
    %v333 = vpack.c.bf16 %v328, %v328
    %v334 = vld [vmem:[#allocation10] sm:$0xff]
    %v335 = vld [vmem:[#allocation10 + $0x8] sm:$0xff]
    %v336 = vld [vmem:[#allocation10 + $0x10] sm:$0xff]
    %v337 = vld [vmem:[#allocation10 + $0x18] sm:$0xff]
    %v338 = vld [vmem:[#allocation10 + $0x20] sm:$0xff]
    %v339 = vld [vmem:[#allocation10 + $0x28] sm:$0xff]
    %v340 = vld [vmem:[#allocation10 + $0x30] sm:$0xff]
    %v341 = vld [vmem:[#allocation10 + $0x38] sm:$0xff]
    %v342 = vld [vmem:[#allocation10 + $0x40] sm:$0xff]
    %v343 = vld [vmem:[#allocation10 + $0x48] sm:$0xff]
    %v344 = vld [vmem:[#allocation10 + $0x50] sm:$0xff]
    %v345 = vld [vmem:[#allocation10 + $0x58] sm:$0xff]
    %v346 = vld [vmem:[#allocation10 + $0x60] sm:$0xff]
    %v347 = vld [vmem:[#allocation10 + $0x68] sm:$0xff]
    %v348 = vld [vmem:[#allocation10 + $0x70] sm:$0xff]
    %v349 = vld [vmem:[#allocation10 + $0x78] sm:$0xff]
    %v350 = vld [vmem:[#allocation10 + $0x80] sm:$0xff]
    %v351 = vld [vmem:[#allocation10 + $0x88] sm:$0xff]
    %v352 = vld [vmem:[#allocation10 + $0x90] sm:$0xff]
    %v353 = vld [vmem:[#allocation10 + $0x98] sm:$0xff]
    %v354 = vld [vmem:[#allocation10 + $0xa0] sm:$0xff]
    %v355 = vld [vmem:[#allocation10 + $0xa8] sm:$0xff]
    %v356 = vld [vmem:[#allocation10 + $0xb0] sm:$0xff]
    %v357 = vld [vmem:[#allocation10 + $0xb8] sm:$0xff]
    %v358 = vld [vmem:[#allocation10 + $0xc0] sm:$0xff]
    %v359 = vld [vmem:[#allocation10 + $0xc8] sm:$0xff]
    %v360 = vld [vmem:[#allocation10 + $0xd0] sm:$0xff]
    %v361 = vld [vmem:[#allocation10 + $0xd8] sm:$0xff]
    %v362 = vld [vmem:[#allocation10 + $0xe0] sm:$0xff]
    %v363 = vld [vmem:[#allocation10 + $0xe8] sm:$0xff]
    %v364 = vld [vmem:[#allocation10 + $0xf0] sm:$0xff]
    %v365 = vld [vmem:[#allocation10 + $0xf8] sm:$0xff]
    %v366 = vld [vmem:[%s6] sm:$0xf]
    %v368 = vlaneseq
    %v369 = vshrl.u32 %v368, 7
    %v370 = vsub.s32 0, %v369
    %v371 = vrot.slane %v366, %v370
    %v372 = vlaneseq
    %v373 = vshrl.u32 %v372, 7
    %v374 = vsub.s32 1, %v373
    %v375 = vrot.slane %v366, %v374
    %v376 = vlaneseq
    %v377 = vshrl.u32 %v376, 7
    %v378 = vsub.s32 2, %v377
    %v379 = vrot.slane %v366, %v378
    %v380 = vlaneseq
    %v381 = vshrl.u32 %v380, 7
    %v382 = vsub.s32 3, %v381
    %v383 = vrot.slane %v366, %v382
    %v420 = vunpack.c.l.b16 %v334
    %v421 = vunpack.c.h.b16 %v334
    %v422 = vunpack.c.l.b16 %v335
    %v423 = vunpack.c.h.b16 %v335
    %v424 = vunpack.c.l.b16 %v336
    %v425 = vunpack.c.h.b16 %v336
    %v426 = vunpack.c.l.b16 %v337
    %v427 = vunpack.c.h.b16 %v337
    %v428 = vunpack.c.l.b16 %v338
    %v429 = vunpack.c.h.b16 %v338
    %v430 = vunpack.c.l.b16 %v339
    %v431 = vunpack.c.h.b16 %v339
    %v432 = vunpack.c.l.b16 %v340
    %v433 = vunpack.c.h.b16 %v340
    %v434 = vunpack.c.l.b16 %v341
    %v435 = vunpack.c.h.b16 %v341
    %v436 = vunpack.c.l.b16 %v342
    %v437 = vunpack.c.h.b16 %v342
    %v438 = vunpack.c.l.b16 %v343
    %v439 = vunpack.c.h.b16 %v343
    %v440 = vunpack.c.l.b16 %v344
    %v441 = vunpack.c.h.b16 %v344
    %v442 = vunpack.c.l.b16 %v345
    %v443 = vunpack.c.h.b16 %v345
    %v444 = vunpack.c.l.b16 %v346
    %v445 = vunpack.c.h.b16 %v346
    %v446 = vunpack.c.l.b16 %v347
    %v447 = vunpack.c.h.b16 %v347
    %v448 = vunpack.c.l.b16 %v348
    %v449 = vunpack.c.h.b16 %v348
    %v450 = vunpack.c.l.b16 %v349
    %v451 = vunpack.c.h.b16 %v349
    %v452 = vunpack.c.l.b16 %v350
    %v453 = vunpack.c.h.b16 %v350
    %v454 = vunpack.c.l.b16 %v351
    %v455 = vunpack.c.h.b16 %v351
    %v456 = vunpack.c.l.b16 %v352
    %v457 = vunpack.c.h.b16 %v352
    %v458 = vunpack.c.l.b16 %v353
    %v459 = vunpack.c.h.b16 %v353
    %v460 = vunpack.c.l.b16 %v354
    %v461 = vunpack.c.h.b16 %v354
    %v462 = vunpack.c.l.b16 %v355
    %v463 = vunpack.c.h.b16 %v355
    %v464 = vunpack.c.l.b16 %v356
    %v465 = vunpack.c.h.b16 %v356
    %v466 = vunpack.c.l.b16 %v357
    %v467 = vunpack.c.h.b16 %v357
    %v468 = vunpack.c.l.b16 %v358
    %v469 = vunpack.c.h.b16 %v358
    %v470 = vunpack.c.l.b16 %v359
    %v471 = vunpack.c.h.b16 %v359
    %v472 = vunpack.c.l.b16 %v360
    %v473 = vunpack.c.h.b16 %v360
    %v474 = vunpack.c.l.b16 %v361
    %v475 = vunpack.c.h.b16 %v361
    %v476 = vunpack.c.l.b16 %v362
    %v477 = vunpack.c.h.b16 %v362
    %v478 = vunpack.c.l.b16 %v363
    %v479 = vunpack.c.h.b16 %v363
    %v480 = vunpack.c.l.b16 %v364
    %v481 = vunpack.c.h.b16 %v364
    %v482 = vunpack.c.l.b16 %v365
    %v483 = vunpack.c.h.b16 %v365
    %v484 = vpack.c.b16 %v424, %v420
    %v485 = vpack.c.b16 %v425, %v421
    %v486 = vpack.c.b16 %v426, %v422
    %v487 = vpack.c.b16 %v427, %v423
    %v488 = vpack.c.b16 %v432, %v428
    %v489 = vpack.c.b16 %v433, %v429
    %v490 = vpack.c.b16 %v434, %v430
    %v491 = vpack.c.b16 %v435, %v431
    %v492 = vpack.c.b16 %v440, %v436
    %v493 = vpack.c.b16 %v441, %v437
    %v494 = vpack.c.b16 %v442, %v438
    %v495 = vpack.c.b16 %v443, %v439
    %v496 = vpack.c.b16 %v448, %v444
    %v497 = vpack.c.b16 %v449, %v445
    %v498 = vpack.c.b16 %v450, %v446
    %v499 = vpack.c.b16 %v451, %v447
    %v500 = vpack.c.b16 %v456, %v452
    %v501 = vpack.c.b16 %v457, %v453
    %v502 = vpack.c.b16 %v458, %v454
    %v503 = vpack.c.b16 %v459, %v455
    %v504 = vpack.c.b16 %v464, %v460
    %v505 = vpack.c.b16 %v465, %v461
    %v506 = vpack.c.b16 %v466, %v462
    %v507 = vpack.c.b16 %v467, %v463
    %v508 = vpack.c.b16 %v472, %v468
    %v509 = vpack.c.b16 %v473, %v469
    %v510 = vpack.c.b16 %v474, %v470
    %v511 = vpack.c.b16 %v475, %v471
    %v512 = vpack.c.b16 %v480, %v476
    %v513 = vpack.c.b16 %v481, %v477
    %v514 = vpack.c.b16 %v482, %v478
    %v515 = vpack.c.b16 %v483, %v479
    %548 = vmatprep.subr.bf16.mxu0 %v485
    %549 = vmatpush1.bf16.msra.mxu0 %v484
    %550 = vmatprep.subr.bf16.mxu0 %v489
    %551 = vmatpush1.bf16.msra.mxu0 %v488
    %552 = vmatprep.subr.bf16.mxu0 %v493
    %553 = vmatpush1.bf16.msra.mxu0 %v492
    %554 = vmatprep.subr.bf16.mxu0 %v497
    %555 = vmatpush1.bf16.msra.mxu0 %v496
    %556 = vmatprep.subr.bf16.mxu0 %v501
    %557 = vmatpush1.bf16.msra.mxu0 %v500
    %558 = vmatprep.subr.bf16.mxu0 %v505
    %559 = vmatpush1.bf16.msra.mxu0 %v504
    %560 = vmatprep.subr.bf16.mxu0 %v509
    %561 = vmatpush1.bf16.msra.mxu0 %v508
    %562 = vmatprep.subr.bf16.mxu0 %v513
    %563 = vmatpush1.bf16.msra.mxu0 %v512
    %564 = vmatprep.subr.bf16.mxu0 0
    %565 = vmatpush1.bf16.msra.mxu0 0
    %566 = vmatprep.subr.bf16.mxu0 0
    %567 = vmatpush1.bf16.msra.mxu0 0
    %568 = vmatprep.subr.bf16.mxu0 0
    %569 = vmatpush1.bf16.msra.mxu0 0
    %570 = vmatprep.subr.bf16.mxu0 0
    %571 = vmatpush1.bf16.msra.mxu0 0
    %572 = vmatprep.subr.bf16.mxu0 0
    %573 = vmatpush1.bf16.msra.mxu0 0
    %574 = vmatprep.subr.bf16.mxu0 0
    %575 = vmatpush1.bf16.msra.mxu0 0
    %576 = vmatprep.subr.bf16.mxu0 0
    %577 = vmatpush1.bf16.msra.mxu0 0
    %578 = vmatprep.subr.bf16.mxu0 0
    %579 = vmatpush1.bf16.msra.mxu0 0
    %580 = vmatprep.mubr.bf16.mxu0 0
    %581 = vmatmul.mubr.bf16.gmra.mrb[0].mxu0 %v333
    %v582 = vpop.f32.mrb[0].mxu0
    %v583 = vadd.f32 %v371, %v582
    %v584 = vpop.f32.mrb[0].mxu0
    %v585 = vadd.f32 %v375, %v584
    %v586 = vpop.f32.mrb[0].mxu0
    %v587 = vpop.f32.mrb[0].mxu0
    %588 = vdwg.mxu0
    %589 = vmatprep.subr.bf16.mxu0 %v487
    %590 = vmatpush1.bf16.msra.mxu0 %v486
    %591 = vmatprep.subr.bf16.mxu0 %v491
    %592 = vmatpush1.bf16.msra.mxu0 %v490
    %593 = vmatprep.subr.bf16.mxu0 %v495
    %594 = vmatpush1.bf16.msra.mxu0 %v494
    %595 = vmatprep.subr.bf16.mxu0 %v499
    %596 = vmatpush1.bf16.msra.mxu0 %v498
    %597 = vmatprep.subr.bf16.mxu0 %v503
    %598 = vmatpush1.bf16.msra.mxu0 %v502
    %599 = vmatprep.subr.bf16.mxu0 %v507
    %600 = vmatpush1.bf16.msra.mxu0 %v506
    %601 = vmatprep.subr.bf16.mxu0 %v511
    %602 = vmatpush1.bf16.msra.mxu0 %v510
    %603 = vmatprep.subr.bf16.mxu0 %v515
    %604 = vmatpush1.bf16.msra.mxu0 %v514
    %605 = vmatprep.subr.bf16.mxu0 0
    %606 = vmatpush1.bf16.msra.mxu0 0
    %607 = vmatprep.subr.bf16.mxu0 0
    %608 = vmatpush1.bf16.msra.mxu0 0
    %609 = vmatprep.subr.bf16.mxu0 0
    %610 = vmatpush1.bf16.msra.mxu0 0
    %611 = vmatprep.subr.bf16.mxu0 0
    %612 = vmatpush1.bf16.msra.mxu0 0
    %613 = vmatprep.subr.bf16.mxu0 0
    %614 = vmatpush1.bf16.msra.mxu0 0
    %615 = vmatprep.subr.bf16.mxu0 0
    %616 = vmatpush1.bf16.msra.mxu0 0
    %617 = vmatprep.subr.bf16.mxu0 0
    %618 = vmatpush1.bf16.msra.mxu0 0
    %619 = vmatprep.subr.bf16.mxu0 0
    %620 = vmatpush1.bf16.msra.mxu0 0
    %621 = vmatprep.mubr.bf16.mxu0 0
    %622 = vmatmul.mubr.bf16.gmra.mrb[0].mxu0 %v333
    %v623 = vpop.f32.mrb[0].mxu0
    %v624 = vadd.f32 %v379, %v623
    %v625 = vpop.f32.mrb[0].mxu0
    %v626 = vadd.f32 %v383, %v625
    %v627 = vpop.f32.mrb[0].mxu0
    %v628 = vpop.f32.mrb[0].mxu0
    %629 = vdwg.mxu0
    %v630 = vld [vmem:[#allocation7] sm:$0xf]
    %v631 = vld [vmem:[#allocation7 + $0x4] sm:$0xf]
    %v632 = vld [vmem:[#allocation7 + $0x8] sm:$0xf]
    %v633 = vld [vmem:[#allocation7 + $0xc] sm:$0xf]
    %v634 = vld [vmem:[#allocation7 + $0x10] sm:$0xf]
    %v635 = vld [vmem:[#allocation12] sm:$0xff]
    %v636 = vld [vmem:[#allocation12 + $0x8] sm:$0xff]
    %v637 = vld [vmem:[#allocation12 + $0x10] sm:$0xff]
    %v638 = vld [vmem:[#allocation12 + $0x18] sm:$0xff]
    %v639 = vld [vmem:[#allocation12 + $0x20] sm:$0xff]
    %v640 = vld [vmem:[#allocation12 + $0x28] sm:$0xff]
    %v641 = vld [vmem:[#allocation12 + $0x30] sm:$0xff]
    %v642 = vld [vmem:[#allocation12 + $0x38] sm:$0xff]
    %v643 = vld [vmem:[#allocation12 + $0x40] sm:$0xff]
    %v644 = vld [vmem:[#allocation12 + $0x48] sm:$0xff]
    %v645 = vld [vmem:[#allocation12 + $0x50] sm:$0xff]
    %v646 = vld [vmem:[#allocation12 + $0x58] sm:$0xff]
    %v647 = vld [vmem:[#allocation12 + $0x60] sm:$0xff]
    %v648 = vld [vmem:[#allocation12 + $0x68] sm:$0xff]
    %v649 = vld [vmem:[#allocation12 + $0x70] sm:$0xff]
    %v650 = vld [vmem:[#allocation12 + $0x78] sm:$0xff]
    %v651 = vld [vmem:[#allocation12 + $0x80] sm:$0xff]
    %v652 = vld [vmem:[#allocation12 + $0x88] sm:$0xff]
    %v653 = vld [vmem:[#allocation12 + $0x90] sm:$0xff]
    %v654 = vld [vmem:[#allocation12 + $0x98] sm:$0xff]
    %v655 = vld [vmem:[#allocation12 + $0xa0] sm:$0xff]
    %v656 = vld [vmem:[#allocation12 + $0xa8] sm:$0xff]
    %v657 = vld [vmem:[#allocation12 + $0xb0] sm:$0xff]
    %v658 = vld [vmem:[#allocation12 + $0xb8] sm:$0xff]
    %v659 = vld [vmem:[#allocation12 + $0xc0] sm:$0xff]
    %v660 = vld [vmem:[#allocation12 + $0xc8] sm:$0xff]
    %v661 = vld [vmem:[#allocation12 + $0xd0] sm:$0xff]
    %v662 = vld [vmem:[#allocation12 + $0xd8] sm:$0xff]
    %v663 = vld [vmem:[#allocation12 + $0xe0] sm:$0xff]
    %v664 = vld [vmem:[#allocation12 + $0xe8] sm:$0xff]
    %v665 = vld [vmem:[#allocation12 + $0xf0] sm:$0xff]
    %v666 = vld [vmem:[#allocation12 + $0xf8] sm:$0xff]
    %v672 = vunpack.c.l.b16 %v630
    %v673 = vunpack.c.l.b16 %v631
    %v674 = vunpack.c.l.b16 %v632
    %v675 = vunpack.c.l.b16 %v633
    %v676 = vunpack.c.l.b16 %v634
    %v677 = vpack.c.b16 %v673, %v672
    %v678 = vpack.c.b16 %v675, %v674
    %v679 = vpack.c.b16 %v676, %v676
    %v715 = vunpack.c.l.b16 %v635
    %v716 = vunpack.c.h.b16 %v635
    %v717 = vunpack.c.l.b16 %v636
    %v718 = vunpack.c.h.b16 %v636
    %v719 = vunpack.c.l.b16 %v637
    %v720 = vunpack.c.h.b16 %v637
    %v721 = vunpack.c.l.b16 %v638
    %v722 = vunpack.c.h.b16 %v638
    %v723 = vunpack.c.l.b16 %v639
    %v724 = vunpack.c.h.b16 %v639
    %v725 = vunpack.c.l.b16 %v640
    %v726 = vunpack.c.h.b16 %v640
    %v727 = vunpack.c.l.b16 %v641
    %v728 = vunpack.c.h.b16 %v641
    %v729 = vunpack.c.l.b16 %v642
    %v730 = vunpack.c.h.b16 %v642
    %v731 = vunpack.c.l.b16 %v643
    %v732 = vunpack.c.h.b16 %v643
    %v733 = vunpack.c.l.b16 %v644
    %v734 = vunpack.c.h.b16 %v644
    %v735 = vunpack.c.l.b16 %v645
    %v736 = vunpack.c.h.b16 %v645
    %v737 = vunpack.c.l.b16 %v646
    %v738 = vunpack.c.h.b16 %v646
    %v739 = vunpack.c.l.b16 %v647
    %v740 = vunpack.c.h.b16 %v647
    %v741 = vunpack.c.l.b16 %v648
    %v742 = vunpack.c.h.b16 %v648
    %v743 = vunpack.c.l.b16 %v649
    %v744 = vunpack.c.h.b16 %v649
    %v745 = vunpack.c.l.b16 %v650
    %v746 = vunpack.c.h.b16 %v650
    %v747 = vunpack.c.l.b16 %v651
    %v748 = vunpack.c.h.b16 %v651
    %v749 = vunpack.c.l.b16 %v652
    %v750 = vunpack.c.h.b16 %v652
    %v751 = vunpack.c.l.b16 %v653
    %v752 = vunpack.c.h.b16 %v653
    %v753 = vunpack.c.l.b16 %v654
    %v754 = vunpack.c.h.b16 %v654
    %v755 = vunpack.c.l.b16 %v655
    %v756 = vunpack.c.h.b16 %v655
    %v757 = vunpack.c.l.b16 %v656
    %v758 = vunpack.c.h.b16 %v656
    %v759 = vunpack.c.l.b16 %v657
    %v760 = vunpack.c.h.b16 %v657
    %v761 = vunpack.c.l.b16 %v658
    %v762 = vunpack.c.h.b16 %v658
    %v763 = vunpack.c.l.b16 %v659
    %v764 = vunpack.c.h.b16 %v659
    %v765 = vunpack.c.l.b16 %v660
    %v766 = vunpack.c.h.b16 %v660
    %v767 = vunpack.c.l.b16 %v661
    %v768 = vunpack.c.h.b16 %v661
    %v769 = vunpack.c.l.b16 %v662
    %v770 = vunpack.c.h.b16 %v662
    %v771 = vunpack.c.l.b16 %v663
    %v772 = vunpack.c.h.b16 %v663
    %v773 = vunpack.c.l.b16 %v664
    %v774 = vunpack.c.h.b16 %v664
    %v775 = vunpack.c.l.b16 %v665
    %v776 = vunpack.c.h.b16 %v665
    %v777 = vunpack.c.l.b16 %v666
    %v778 = vunpack.c.h.b16 %v666
    %v779 = vpack.c.b16 %v719, %v715
    %v780 = vpack.c.b16 %v720, %v716
    %v781 = vpack.c.b16 %v721, %v717
    %v782 = vpack.c.b16 %v722, %v718
    %v783 = vpack.c.b16 %v727, %v723
    %v784 = vpack.c.b16 %v728, %v724
    %v785 = vpack.c.b16 %v729, %v725
    %v786 = vpack.c.b16 %v730, %v726
    %v787 = vpack.c.b16 %v735, %v731
    %v788 = vpack.c.b16 %v736, %v732
    %v789 = vpack.c.b16 %v737, %v733
    %v790 = vpack.c.b16 %v738, %v734
    %v791 = vpack.c.b16 %v743, %v739
    %v792 = vpack.c.b16 %v744, %v740
    %v793 = vpack.c.b16 %v745, %v741
    %v794 = vpack.c.b16 %v746, %v742
    %v795 = vpack.c.b16 %v751, %v747
    %v796 = vpack.c.b16 %v752, %v748
    %v797 = vpack.c.b16 %v753, %v749
    %v798 = vpack.c.b16 %v754, %v750
    %v799 = vpack.c.b16 %v759, %v755
    %v800 = vpack.c.b16 %v760, %v756
    %v801 = vpack.c.b16 %v761, %v757
    %v802 = vpack.c.b16 %v762, %v758
    %v803 = vpack.c.b16 %v767, %v763
    %v804 = vpack.c.b16 %v768, %v764
    %v805 = vpack.c.b16 %v769, %v765
    %v806 = vpack.c.b16 %v770, %v766
    %v807 = vpack.c.b16 %v775, %v771
    %v808 = vpack.c.b16 %v776, %v772
    %v809 = vpack.c.b16 %v777, %v773
    %v810 = vpack.c.b16 %v778, %v774
    %843 = vmatprep.subr.bf16.mxu0 %v780
    %844 = vmatpush1.bf16.msra.mxu0 %v779
    %845 = vmatprep.subr.bf16.mxu0 %v784
    %846 = vmatpush1.bf16.msra.mxu0 %v783
    %847 = vmatprep.subr.bf16.mxu0 %v788
    %848 = vmatpush1.bf16.msra.mxu0 %v787
    %849 = vmatprep.subr.bf16.mxu0 %v792
    %850 = vmatpush1.bf16.msra.mxu0 %v791
    %851 = vmatprep.subr.bf16.mxu0 %v796
    %852 = vmatpush1.bf16.msra.mxu0 %v795
    %853 = vmatprep.subr.bf16.mxu0 %v800
    %854 = vmatpush1.bf16.msra.mxu0 %v799
    %855 = vmatprep.subr.bf16.mxu0 %v804
    %856 = vmatpush1.bf16.msra.mxu0 %v803
    %857 = vmatprep.subr.bf16.mxu0 %v808
    %858 = vmatpush1.bf16.msra.mxu0 %v807
    %859 = vmatprep.subr.bf16.mxu0 0
    %860 = vmatpush1.bf16.msra.mxu0 0
    %861 = vmatprep.subr.bf16.mxu0 0
    %862 = vmatpush1.bf16.msra.mxu0 0
    %863 = vmatprep.subr.bf16.mxu0 0
    %864 = vmatpush1.bf16.msra.mxu0 0
    %865 = vmatprep.subr.bf16.mxu0 0
    %866 = vmatpush1.bf16.msra.mxu0 0
    %867 = vmatprep.subr.bf16.mxu0 0
    %868 = vmatpush1.bf16.msra.mxu0 0
    %869 = vmatprep.subr.bf16.mxu0 0
    %870 = vmatpush1.bf16.msra.mxu0 0
    %871 = vmatprep.subr.bf16.mxu0 0
    %872 = vmatpush1.bf16.msra.mxu0 0
    %873 = vmatprep.subr.bf16.mxu0 0
    %874 = vmatpush1.bf16.msra.mxu0 0
    %875 = vmatprep.mubr.bf16.mxu0 0
    %876 = vmatmul.mubr.bf16.gmra.mrb[0].mxu0 %v677
    %v877 = vpop.f32.mrb[0].mxu0
    %v878 = vadd.f32 %v583, %v877
    %v879 = vpop.f32.mrb[0].mxu0
    %v880 = vadd.f32 %v585, %v879
    %v881 = vpop.f32.mrb[0].mxu0
    %v882 = vadd.f32 %v583, %v881
    %v883 = vpop.f32.mrb[0].mxu0
    %v884 = vadd.f32 %v585, %v883
    %885 = vmatprep.mubr.bf16.mxu0 0
    %886 = vmatmul.mubr.bf16.gmra.mrb[0].mxu0 %v678
    %v887 = vpop.f32.mrb[0].mxu0
    %v888 = vadd.f32 %v583, %v887
    %v889 = vpop.f32.mrb[0].mxu0
    %v890 = vadd.f32 %v585, %v889
    %v891 = vpop.f32.mrb[0].mxu0
    %v892 = vadd.f32 %v583, %v891
    %v893 = vpop.f32.mrb[0].mxu0
    %v894 = vadd.f32 %v585, %v893
    %895 = vmatprep.mubr.bf16.mxu0 0
    %896 = vmatmul.mubr.bf16.gmra.mrb[0].mxu0 %v679
    %v897 = vpop.f32.mrb[0].mxu0
    %v898 = vadd.f32 %v583, %v897
    %v899 = vpop.f32.mrb[0].mxu0
    %v900 = vadd.f32 %v585, %v899
    %v901 = vpop.f32.mrb[0].mxu0
    %v902 = vpop.f32.mrb[0].mxu0
    %903 = vdwg.mxu0
    %904 = vmatprep.subr.bf16.mxu0 %v782
    %905 = vmatpush1.bf16.msra.mxu0 %v781
    %906 = vmatprep.subr.bf16.mxu0 %v786
    %907 = vmatpush1.bf16.msra.mxu0 %v785
    %908 = vmatprep.subr.bf16.mxu0 %v790
    %909 = vmatpush1.bf16.msra.mxu0 %v789
    %910 = vmatprep.subr.bf16.mxu0 %v794
    %911 = vmatpush1.bf16.msra.mxu0 %v793
    %912 = vmatprep.subr.bf16.mxu0 %v798
    %913 = vmatpush1.bf16.msra.mxu0 %v797
    %914 = vmatprep.subr.bf16.mxu0 %v802
    %915 = vmatpush1.bf16.msra.mxu0 %v801
    %916 = vmatprep.subr.bf16.mxu0 %v806
    %917 = vmatpush1.bf16.msra.mxu0 %v805
    %918 = vmatprep.subr.bf16.mxu0 %v810
    %919 = vmatpush1.bf16.msra.mxu0 %v809
    %920 = vmatprep.subr.bf16.mxu0 0
    %921 = vmatpush1.bf16.msra.mxu0 0
    %922 = vmatprep.subr.bf16.mxu0 0
    %923 = vmatpush1.bf16.msra.mxu0 0
    %924 = vmatprep.subr.bf16.mxu0 0
    %925 = vmatpush1.bf16.msra.mxu0 0
    %926 = vmatprep.subr.bf16.mxu0 0
    %927 = vmatpush1.bf16.msra.mxu0 0
    %928 = vmatprep.subr.bf16.mxu0 0
    %929 = vmatpush1.bf16.msra.mxu0 0
    %930 = vmatprep.subr.bf16.mxu0 0
    %931 = vmatpush1.bf16.msra.mxu0 0
    %932 = vmatprep.subr.bf16.mxu0 0
    %933 = vmatpush1.bf16.msra.mxu0 0
    %934 = vmatprep.subr.bf16.mxu0 0
    %935 = vmatpush1.bf16.msra.mxu0 0
    %936 = vmatprep.mubr.bf16.mxu0 0
    %937 = vmatmul.mubr.bf16.gmra.mrb[0].mxu0 %v677
    %v938 = vpop.f32.mrb[0].mxu0
    %v939 = vadd.f32 %v624, %v938
    %v940 = vpop.f32.mrb[0].mxu0
    %v941 = vadd.f32 %v626, %v940
    %v942 = vpop.f32.mrb[0].mxu0
    %v943 = vadd.f32 %v624, %v942
    %v944 = vpop.f32.mrb[0].mxu0
    %v945 = vadd.f32 %v626, %v944
    %946 = vmatprep.mubr.bf16.mxu0 0
    %947 = vmatmul.mubr.bf16.gmra.mrb[0].mxu0 %v678
    %v948 = vpop.f32.mrb[0].mxu0
    %v949 = vadd.f32 %v624, %v948
    %v950 = vpop.f32.mrb[0].mxu0
    %v951 = vadd.f32 %v626, %v950
    %v952 = vpop.f32.mrb[0].mxu0
    %v953 = vadd.f32 %v624, %v952
    %v954 = vpop.f32.mrb[0].mxu0
    %v955 = vadd.f32 %v626, %v954
    %956 = vmatprep.mubr.bf16.mxu0 0
    %957 = vmatmul.mubr.bf16.gmra.mrb[0].mxu0 %v679
    %v958 = vpop.f32.mrb[0].mxu0
    %v959 = vadd.f32 %v624, %v958
    %v960 = vpop.f32.mrb[0].mxu0
    %v961 = vadd.f32 %v626, %v960
    %v962 = vpop.f32.mrb[0].mxu0
    %v963 = vpop.f32.mrb[0].mxu0
    %964 = vdwg.mxu0
    %v965 = vld [vmem:[#allocation13] sm:$0xff]
    %v966 = vld [vmem:[#allocation13 + $0x8] sm:$0xff]
    %v967 = vld [vmem:[#allocation13 + $0x10] sm:$0xff]
    %v968 = vld [vmem:[#allocation13 + $0x18] sm:$0xff]
    %v969 = vld [vmem:[#allocation13 + $0x20] sm:$0xff]
    %v970 = vld [vmem:[#allocation13 + $0x28] sm:$0xff]
    %v971 = vld [vmem:[#allocation13 + $0x30] sm:$0xff]
    %v972 = vld [vmem:[#allocation13 + $0x38] sm:$0xff]
    %v973 = vld [vmem:[#allocation13 + $0x40] sm:$0xff]
    %v974 = vld [vmem:[#allocation13 + $0x48] sm:$0xff]
    %v975 = vld [vmem:[#allocation13 + $0x50] sm:$0xff]
    %v976 = vld [vmem:[#allocation13 + $0x58] sm:$0xff]
    %v977 = vld [vmem:[#allocation13 + $0x60] sm:$0xff]
    %v978 = vld [vmem:[#allocation13 + $0x68] sm:$0xff]
    %v979 = vld [vmem:[#allocation13 + $0x70] sm:$0xff]
    %v980 = vld [vmem:[#allocation13 + $0x78] sm:$0xff]
    %v981 = vld [vmem:[#allocation13 + $0x80] sm:$0xff]
    %v982 = vld [vmem:[#allocation13 + $0x88] sm:$0xff]
    %v983 = vld [vmem:[#allocation13 + $0x90] sm:$0xff]
    %v984 = vld [vmem:[#allocation13 + $0x98] sm:$0xff]
    %v985 = vld [vmem:[#allocation13 + $0xa0] sm:$0xff]
    %v986 = vld [vmem:[#allocation13 + $0xa8] sm:$0xff]
    %v987 = vld [vmem:[#allocation13 + $0xb0] sm:$0xff]
    %v988 = vld [vmem:[#allocation13 + $0xb8] sm:$0xff]
    %v989 = vld [vmem:[#allocation13 + $0xc0] sm:$0xff]
    %v990 = vld [vmem:[#allocation13 + $0xc8] sm:$0xff]
    %v991 = vld [vmem:[#allocation13 + $0xd0] sm:$0xff]
    %v992 = vld [vmem:[#allocation13 + $0xd8] sm:$0xff]
    %v993 = vld [vmem:[#allocation13 + $0xe0] sm:$0xff]
    %v994 = vld [vmem:[#allocation13 + $0xe8] sm:$0xff]
    %v995 = vld [vmem:[#allocation13 + $0xf0] sm:$0xff]
    %v996 = vld [vmem:[#allocation13 + $0xf8] sm:$0xff]
    %v1029 = vunpack.c.l.b16 %v965
    %v1030 = vunpack.c.h.b16 %v965
    %v1031 = vunpack.c.l.b16 %v966
    %v1032 = vunpack.c.h.b16 %v966
    %v1033 = vunpack.c.l.b16 %v967
    %v1034 = vunpack.c.h.b16 %v967
    %v1035 = vunpack.c.l.b16 %v968
    %v1036 = vunpack.c.h.b16 %v968
    %v1037 = vunpack.c.l.b16 %v969
    %v1038 = vunpack.c.h.b16 %v969
    %v1039 = vunpack.c.l.b16 %v970
    %v1040 = vunpack.c.h.b16 %v970
    %v1041 = vunpack.c.l.b16 %v971
    %v1042 = vunpack.c.h.b16 %v971
    %v1043 = vunpack.c.l.b16 %v972
    %v1044 = vunpack.c.h.b16 %v972
    %v1045 = vunpack.c.l.b16 %v973
    %v1046 = vunpack.c.h.b16 %v973
    %v1047 = vunpack.c.l.b16 %v974
    %v1048 = vunpack.c.h.b16 %v974
    %v1049 = vunpack.c.l.b16 %v975
    %v1050 = vunpack.c.h.b16 %v975
    %v1051 = vunpack.c.l.b16 %v976
    %v1052 = vunpack.c.h.b16 %v976
    %v1053 = vunpack.c.l.b16 %v977
    %v1054 = vunpack.c.h.b16 %v977
    %v1055 = vunpack.c.l.b16 %v978
    %v1056 = vunpack.c.h.b16 %v978
    %v1057 = vunpack.c.l.b16 %v979
    %v1058 = vunpack.c.h.b16 %v979
    %v1059 = vunpack.c.l.b16 %v980
    %v1060 = vunpack.c.h.b16 %v980
    %v1061 = vunpack.c.l.b16 %v981
    %v1062 = vunpack.c.h.b16 %v981
    %v1063 = vunpack.c.l.b16 %v982
    %v1064 = vunpack.c.h.b16 %v982
    %v1065 = vunpack.c.l.b16 %v983
    %v1066 = vunpack.c.h.b16 %v983
    %v1067 = vunpack.c.l.b16 %v984
    %v1068 = vunpack.c.h.b16 %v984
    %v1069 = vunpack.c.l.b16 %v985
    %v1070 = vunpack.c.h.b16 %v985
    %v1071 = vunpack.c.l.b16 %v986
    %v1072 = vunpack.c.h.b16 %v986
    %v1073 = vunpack.c.l.b16 %v987
    %v1074 = vunpack.c.h.b16 %v987
    %v1075 = vunpack.c.l.b16 %v988
    %v1076 = vunpack.c.h.b16 %v988
    %v1077 = vunpack.c.l.b16 %v989
    %v1078 = vunpack.c.h.b16 %v989
    %v1079 = vunpack.c.l.b16 %v990
    %v1080 = vunpack.c.h.b16 %v990
    %v1081 = vunpack.c.l.b16 %v991
    %v1082 = vunpack.c.h.b16 %v991
    %v1083 = vunpack.c.l.b16 %v992
    %v1084 = vunpack.c.h.b16 %v992
    %v1085 = vunpack.c.l.b16 %v993
    %v1086 = vunpack.c.h.b16 %v993
    %v1087 = vunpack.c.l.b16 %v994
    %v1088 = vunpack.c.h.b16 %v994
    %v1089 = vunpack.c.l.b16 %v995
    %v1090 = vunpack.c.h.b16 %v995
    %v1091 = vunpack.c.l.b16 %v996
    %v1092 = vunpack.c.h.b16 %v996
    %v1093 = vpack.c.b16 %v1033, %v1029
    %v1094 = vpack.c.b16 %v1034, %v1030
    %v1095 = vpack.c.b16 %v1035, %v1031
    %v1096 = vpack.c.b16 %v1036, %v1032
    %v1097 = vpack.c.b16 %v1041, %v1037
    %v1098 = vpack.c.b16 %v1042, %v1038
    %v1099 = vpack.c.b16 %v1043, %v1039
    %v1100 = vpack.c.b16 %v1044, %v1040
    %v1101 = vpack.c.b16 %v1049, %v1045
    %v1102 = vpack.c.b16 %v1050, %v1046
    %v1103 = vpack.c.b16 %v1051, %v1047
    %v1104 = vpack.c.b16 %v1052, %v1048
    %v1105 = vpack.c.b16 %v1057, %v1053
    %v1106 = vpack.c.b16 %v1058, %v1054
    %v1107 = vpack.c.b16 %v1059, %v1055
    %v1108 = vpack.c.b16 %v1060, %v1056
    %v1109 = vpack.c.b16 %v1065, %v1061
    %v1110 = vpack.c.b16 %v1066, %v1062
    %v1111 = vpack.c.b16 %v1067, %v1063
    %v1112 = vpack.c.b16 %v1068, %v1064
    %v1113 = vpack.c.b16 %v1073, %v1069
    %v1114 = vpack.c.b16 %v1074, %v1070
    %v1115 = vpack.c.b16 %v1075, %v1071
    %v1116 = vpack.c.b16 %v1076, %v1072
    %v1117 = vpack.c.b16 %v1081, %v1077
    %v1118 = vpack.c.b16 %v1082, %v1078
    %v1119 = vpack.c.b16 %v1083, %v1079
    %v1120 = vpack.c.b16 %v1084, %v1080
    %v1121 = vpack.c.b16 %v1089, %v1085
    %v1122 = vpack.c.b16 %v1090, %v1086
    %v1123 = vpack.c.b16 %v1091, %v1087
    %v1124 = vpack.c.b16 %v1092, %v1088
    %1157 = vmatprep.subr.bf16.mxu0 %v1094
    %1158 = vmatpush1.bf16.msra.mxu0 %v1093
    %1159 = vmatprep.subr.bf16.mxu0 %v1098
    %1160 = vmatpush1.bf16.msra.mxu0 %v1097
    %1161 = vmatprep.subr.bf16.mxu0 %v1102
    %1162 = vmatpush1.bf16.msra.mxu0 %v1101
    %1163 = vmatprep.subr.bf16.mxu0 %v1106
    %1164 = vmatpush1.bf16.msra.mxu0 %v1105
    %1165 = vmatprep.subr.bf16.mxu0 %v1110
    %1166 = vmatpush1.bf16.msra.mxu0 %v1109
    %1167 = vmatprep.subr.bf16.mxu0 %v1114
    %1168 = vmatpush1.bf16.msra.mxu0 %v1113
    %1169 = vmatprep.subr.bf16.mxu0 %v1118
    %1170 = vmatpush1.bf16.msra.mxu0 %v1117
    %1171 = vmatprep.subr.bf16.mxu0 %v1122
    %1172 = vmatpush1.bf16.msra.mxu0 %v1121
    %1173 = vmatprep.subr.bf16.mxu0 0
    %1174 = vmatpush1.bf16.msra.mxu0 0
    %1175 = vmatprep.subr.bf16.mxu0 0
    %1176 = vmatpush1.bf16.msra.mxu0 0
    %1177 = vmatprep.subr.bf16.mxu0 0
    %1178 = vmatpush1.bf16.msra.mxu0 0
    %1179 = vmatprep.subr.bf16.mxu0 0
    %1180 = vmatpush1.bf16.msra.mxu0 0
    %1181 = vmatprep.subr.bf16.mxu0 0
    %1182 = vmatpush1.bf16.msra.mxu0 0
    %1183 = vmatprep.subr.bf16.mxu0 0
    %1184 = vmatpush1.bf16.msra.mxu0 0
    %1185 = vmatprep.subr.bf16.mxu0 0
    %1186 = vmatpush1.bf16.msra.mxu0 0
    %1187 = vmatprep.subr.bf16.mxu0 0
    %1188 = vmatpush1.bf16.msra.mxu0 0
    %1189 = vmatprep.mubr.bf16.mxu0 0
    %1190 = vmatmul.mubr.bf16.gmra.mrb[0].mxu0 0
    %v1191 = vpop.f32.mrb[0].mxu0
    %v1192 = vadd.f32 0.0, %v1191
    %v1193 = vpop.f32.mrb[0].mxu0
    %v1194 = vadd.f32 0.0, %v1193
    %v1195 = vpop.f32.mrb[0].mxu0
    %v1196 = vpop.f32.mrb[0].mxu0
    %1197 = vdwg.mxu0
    %1198 = vmatprep.subr.bf16.mxu0 %v1096
    %1199 = vmatpush1.bf16.msra.mxu0 %v1095
    %1200 = vmatprep.subr.bf16.mxu0 %v1100
    %1201 = vmatpush1.bf16.msra.mxu0 %v1099
    %1202 = vmatprep.subr.bf16.mxu0 %v1104
    %1203 = vmatpush1.bf16.msra.mxu0 %v1103
    %1204 = vmatprep.subr.bf16.mxu0 %v1108
    %1205 = vmatpush1.bf16.msra.mxu0 %v1107
    %1206 = vmatprep.subr.bf16.mxu0 %v1112
    %1207 = vmatpush1.bf16.msra.mxu0 %v1111
    %1208 = vmatprep.subr.bf16.mxu0 %v1116
    %1209 = vmatpush1.bf16.msra.mxu0 %v1115
    %1210 = vmatprep.subr.bf16.mxu0 %v1120
    %1211 = vmatpush1.bf16.msra.mxu0 %v1119
    %1212 = vmatprep.subr.bf16.mxu0 %v1124
    %1213 = vmatpush1.bf16.msra.mxu0 %v1123
    %1214 = vmatprep.subr.bf16.mxu0 0
    %1215 = vmatpush1.bf16.msra.mxu0 0
    %1216 = vmatprep.subr.bf16.mxu0 0
    %1217 = vmatpush1.bf16.msra.mxu0 0
    %1218 = vmatprep.subr.bf16.mxu0 0
    %1219 = vmatpush1.bf16.msra.mxu0 0
    %1220 = vmatprep.subr.bf16.mxu0 0
    %1221 = vmatpush1.bf16.msra.mxu0 0
    %1222 = vmatprep.subr.bf16.mxu0 0
    %1223 = vmatpush1.bf16.msra.mxu0 0
    %1224 = vmatprep.subr.bf16.mxu0 0
    %1225 = vmatpush1.bf16.msra.mxu0 0
    %1226 = vmatprep.subr.bf16.mxu0 0
    %1227 = vmatpush1.bf16.msra.mxu0 0
    %1228 = vmatprep.subr.bf16.mxu0 0
    %1229 = vmatpush1.bf16.msra.mxu0 0
    %1230 = vmatprep.mubr.bf16.mxu0 0
    %1231 = vmatmul.mubr.bf16.gmra.mrb[0].mxu0 0
    %v1232 = vpop.f32.mrb[0].mxu0
    %v1233 = vadd.f32 0.0, %v1232
    %v1234 = vpop.f32.mrb[0].mxu0
    %v1235 = vadd.f32 0.0, %v1234
    %v1236 = vpop.f32.mrb[0].mxu0
    %v1237 = vpop.f32.mrb[0].mxu0
    %1238 = vdwg.mxu0
    %v1239 = vadd.f32 %v878, %v1192
    %v1240 = vadd.f32 %v880, %v1194
    %v1241 = vadd.f32 %v939, %v1233
    %v1242 = vadd.f32 %v941, %v1235
    %v1243 = vxor.u32 %v1239, 2147483648
    %v1244 = vmul.f32 %v1243, 1.442695
    %v1245 = vpow.pop %v1244
    %v1246 = vadd.f32 %v1245, 1.0
    %v1247 = vrcp.pop %v1246
    %v1248 = vmul.f32 1.0, %v1247
    %v1249 = vxor.u32 %v1240, 2147483648
    %v1250 = vmul.f32 %v1249, 1.442695
    %v1251 = vpow.pop %v1250
    %v1252 = vadd.f32 %v1251, 1.0
    %v1253 = vrcp.pop %v1252
    %v1254 = vmul.f32 1.0, %v1253
    %v1255 = vtanh.pop %v1241
    %v1256 = vxor.u32 %v1242, 2147483648
    %v1257 = vmul.f32 %v1256, 1.442695
    %v1258 = vpow.pop %v1257
    %v1259 = vadd.f32 %v1258, 1.0
    %v1260 = vrcp.pop %v1259
    %v1261 = vmul.f32 1.0, %v1260
    %v1262 = vmul.f32 %v1254, 0.0
    %v1263 = vmul.f32 %v1248, %v1255
    %v1264 = vadd.f32 %v1262, %v1263
    %v1265 = vtanh.pop %v1264
    %v1266 = vmul.f32 %v1261, %v1265
    %v1267 = vpack.c.bf16 %v1266, %v1266
    %1268 = vmatprep.subr.bf16.mxu0 %v1094
    %1269 = vmatpush1.bf16.msra.mxu0 %v1093
    %1270 = vmatprep.subr.bf16.mxu0 %v1098
    %1271 = vmatpush1.bf16.msra.mxu0 %v1097
    %1272 = vmatprep.subr.bf16.mxu0 %v1102
    %1273 = vmatpush1.bf16.msra.mxu0 %v1101
    %1274 = vmatprep.subr.bf16.mxu0 %v1106
    %1275 = vmatpush1.bf16.msra.mxu0 %v1105
    %1276 = vmatprep.subr.bf16.mxu0 %v1110
    %1277 = vmatpush1.bf16.msra.mxu0 %v1109
    %1278 = vmatprep.subr.bf16.mxu0 %v1114
    %1279 = vmatpush1.bf16.msra.mxu0 %v1113
    %1280 = vmatprep.subr.bf16.mxu0 %v1118
    %1281 = vmatpush1.bf16.msra.mxu0 %v1117
    %1282 = vmatprep.subr.bf16.mxu0 %v1122
    %1283 = vmatpush1.bf16.msra.mxu0 %v1121
    %1284 = vmatprep.subr.bf16.mxu0 0
    %1285 = vmatpush1.bf16.msra.mxu0 0
    %1286 = vmatprep.subr.bf16.mxu0 0
    %1287 = vmatpush1.bf16.msra.mxu0 0
    %1288 = vmatprep.subr.bf16.mxu0 0
    %1289 = vmatpush1.bf16.msra.mxu0 0
    %1290 = vmatprep.subr.bf16.mxu0 0
    %1291 = vmatpush1.bf16.msra.mxu0 0
    %1292 = vmatprep.subr.bf16.mxu0 0
    %1293 = vmatpush1.bf16.msra.mxu0 0
    %1294 = vmatprep.subr.bf16.mxu0 0
    %1295 = vmatpush1.bf16.msra.mxu0 0
    %1296 = vmatprep.subr.bf16.mxu0 0
    %1297 = vmatpush1.bf16.msra.mxu0 0
    %1298 = vmatprep.subr.bf16.mxu0 0
    %1299 = vmatpush1.bf16.msra.mxu0 0
    %1300 = vmatprep.mubr.bf16.mxu0 0
    %1301 = vmatmul.mubr.bf16.gmra.mrb[0].mxu0 %v1267
    %v1302 = vpop.f32.mrb[0].mxu0
    %v1303 = vadd.f32 0.0, %v1302
    %v1304 = vpop.f32.mrb[0].mxu0
    %v1305 = vadd.f32 0.0, %v1304
    %v1306 = vpop.f32.mrb[0].mxu0
    %v1307 = vpop.f32.mrb[0].mxu0
    %1308 = vdwg.mxu0
    %1309 = vmatprep.subr.bf16.mxu0 %v1096
    %1310 = vmatpush1.bf16.msra.mxu0 %v1095
    %1311 = vmatprep.subr.bf16.mxu0 %v1100
    %1312 = vmatpush1.bf16.msra.mxu0 %v1099
    %1313 = vmatprep.subr.bf16.mxu0 %v1104
    %1314 = vmatpush1.bf16.msra.mxu0 %v1103
    %1315 = vmatprep.subr.bf16.mxu0 %v1108
    %1316 = vmatpush1.bf16.msra.mxu0 %v1107
    %1317 = vmatprep.subr.bf16.mxu0 %v1112
    %1318 = vmatpush1.bf16.msra.mxu0 %v1111
    %1319 = vmatprep.subr.bf16.mxu0 %v1116
    %1320 = vmatpush1.bf16.msra.mxu0 %v1115
    %1321 = vmatprep.subr.bf16.mxu0 %v1120
    %1322 = vmatpush1.bf16.msra.mxu0 %v1119
    %1323 = vmatprep.subr.bf16.mxu0 %v1124
    %1324 = vmatpush1.bf16.msra.mxu0 %v1123
    %1325 = vmatprep.subr.bf16.mxu0 0
    %1326 = vmatpush1.bf16.msra.mxu0 0
    %1327 = vmatprep.subr.bf16.mxu0 0
    %1328 = vmatpush1.bf16.msra.mxu0 0
    %1329 = vmatprep.subr.bf16.mxu0 0
    %1330 = vmatpush1.bf16.msra.mxu0 0
    %1331 = vmatprep.subr.bf16.mxu0 0
    %1332 = vmatpush1.bf16.msra.mxu0 0
    %1333 = vmatprep.subr.bf16.mxu0 0
    %1334 = vmatpush1.bf16.msra.mxu0 0
    %1335 = vmatprep.subr.bf16.mxu0 0
    %1336 = vmatpush1.bf16.msra.mxu0 0
    %1337 = vmatprep.subr.bf16.mxu0 0
    %1338 = vmatpush1.bf16.msra.mxu0 0
    %1339 = vmatprep.subr.bf16.mxu0 0
    %1340 = vmatpush1.bf16.msra.mxu0 0
    %1341 = vmatprep.mubr.bf16.mxu0 0
    %1342 = vmatmul.mubr.bf16.gmra.mrb[0].mxu0 %v1267
    %v1343 = vpop.f32.mrb[0].mxu0
    %v1344 = vadd.f32 0.0, %v1343
    %v1345 = vpop.f32.mrb[0].mxu0
    %v1346 = vadd.f32 0.0, %v1345
    %v1347 = vpop.f32.mrb[0].mxu0
    %v1348 = vpop.f32.mrb[0].mxu0
    %1349 = vdwg.mxu0
    %v1350 = vadd.f32 %v882, %v1303
    %v1351 = vadd.f32 %v884, %v1305
    %v1352 = vadd.f32 %v943, %v1344
    %v1353 = vadd.f32 %v945, %v1346
    %v1354 = vxor.u32 %v1350, 2147483648
    %v1355 = vmul.f32 %v1354, 1.442695
    %v1356 = vpow.pop %v1355
    %v1357 = vadd.f32 %v1356, 1.0
    %v1358 = vrcp.pop %v1357
    %v1359 = vmul.f32 1.0, %v1358
    %v1360 = vxor.u32 %v1351, 2147483648
    %v1361 = vmul.f32 %v1360, 1.442695
    %v1362 = vpow.pop %v1361
    %v1363 = vadd.f32 %v1362, 1.0
    %v1364 = vrcp.pop %v1363
    %v1365 = vmul.f32 1.0, %v1364
    %v1366 = vtanh.pop %v1352
    %v1367 = vxor.u32 %v1353, 2147483648
    %v1368 = vmul.f32 %v1367, 1.442695
    %v1369 = vpow.pop %v1368
    %v1370 = vadd.f32 %v1369, 1.0
    %v1371 = vrcp.pop %v1370
    %v1372 = vmul.f32 1.0, %v1371
    %v1373 = vmul.f32 %v1365, %v1264
    %v1374 = vmul.f32 %v1359, %v1366
    %v1375 = vadd.f32 %v1373, %v1374
    %v1376 = vtanh.pop %v1375
    %v1377 = vmul.f32 %v1372, %v1376
    %v1378 = vpack.c.bf16 %v1377, %v1377
    %1379 = vmatprep.subr.bf16.mxu0 %v1094
    %1380 = vmatpush1.bf16.msra.mxu0 %v1093
    %1381 = vmatprep.subr.bf16.mxu0 %v1098
    %1382 = vmatpush1.bf16.msra.mxu0 %v1097
    %1383 = vmatprep.subr.bf16.mxu0 %v1102
    %1384 = vmatpush1.bf16.msra.mxu0 %v1101
    %1385 = vmatprep.subr.bf16.mxu0 %v1106
    %1386 = vmatpush1.bf16.msra.mxu0 %v1105
    %1387 = vmatprep.subr.bf16.mxu0 %v1110
    %1388 = vmatpush1.bf16.msra.mxu0 %v1109
    %1389 = vmatprep.subr.bf16.mxu0 %v1114
    %1390 = vmatpush1.bf16.msra.mxu0 %v1113
    %1391 = vmatprep.subr.bf16.mxu0 %v1118
    %1392 = vmatpush1.bf16.msra.mxu0 %v1117
    %1393 = vmatprep.subr.bf16.mxu0 %v1122
    %1394 = vmatpush1.bf16.msra.mxu0 %v1121
    %1395 = vmatprep.subr.bf16.mxu0 0
    %1396 = vmatpush1.bf16.msra.mxu0 0
    %1397 = vmatprep.subr.bf16.mxu0 0
    %1398 = vmatpush1.bf16.msra.mxu0 0
    %1399 = vmatprep.subr.bf16.mxu0 0
    %1400 = vmatpush1.bf16.msra.mxu0 0
    %1401 = vmatprep.subr.bf16.mxu0 0
    %1402 = vmatpush1.bf16.msra.mxu0 0
    %1403 = vmatprep.subr.bf16.mxu0 0
    %1404 = vmatpush1.bf16.msra.mxu0 0
    %1405 = vmatprep.subr.bf16.mxu0 0
    %1406 = vmatpush1.bf16.msra.mxu0 0
    %1407 = vmatprep.subr.bf16.mxu0 0
    %1408 = vmatpush1.bf16.msra.mxu0 0
    %1409 = vmatprep.subr.bf16.mxu0 0
    %1410 = vmatpush1.bf16.msra.mxu0 0
    %1411 = vmatprep.mubr.bf16.mxu0 0
    %1412 = vmatmul.mubr.bf16.gmra.mrb[0].mxu0 %v1378
    %v1413 = vpop.f32.mrb[0].mxu0
    %v1414 = vadd.f32 0.0, %v1413
    %v1415 = vpop.f32.mrb[0].mxu0
    %v1416 = vadd.f32 0.0, %v1415
    %v1417 = vpop.f32.mrb[0].mxu0
    %v1418 = vpop.f32.mrb[0].mxu0
    %1419 = vdwg.mxu0
    %1420 = vmatprep.subr.bf16.mxu0 %v1096
    %1421 = vmatpush1.bf16.msra.mxu0 %v1095
    %1422 = vmatprep.subr.bf16.mxu0 %v1100
    %1423 = vmatpush1.bf16.msra.mxu0 %v1099
    %1424 = vmatprep.subr.bf16.mxu0 %v1104
    %1425 = vmatpush1.bf16.msra.mxu0 %v1103
    %1426 = vmatprep.subr.bf16.mxu0 %v1108
    %1427 = vmatpush1.bf16.msra.mxu0 %v1107
    %1428 = vmatprep.subr.bf16.mxu0 %v1112
    %1429 = vmatpush1.bf16.msra.mxu0 %v1111
    %1430 = vmatprep.subr.bf16.mxu0 %v1116
    %1431 = vmatpush1.bf16.msra.mxu0 %v1115
    %1432 = vmatprep.subr.bf16.mxu0 %v1120
    %1433 = vmatpush1.bf16.msra.mxu0 %v1119
    %1434 = vmatprep.subr.bf16.mxu0 %v1124
    %1435 = vmatpush1.bf16.msra.mxu0 %v1123
    %1436 = vmatprep.subr.bf16.mxu0 0
    %1437 = vmatpush1.bf16.msra.mxu0 0
    %1438 = vmatprep.subr.bf16.mxu0 0
    %1439 = vmatpush1.bf16.msra.mxu0 0
    %1440 = vmatprep.subr.bf16.mxu0 0
    %1441 = vmatpush1.bf16.msra.mxu0 0
    %1442 = vmatprep.subr.bf16.mxu0 0
    %1443 = vmatpush1.bf16.msra.mxu0 0
    %1444 = vmatprep.subr.bf16.mxu0 0
    %1445 = vmatpush1.bf16.msra.mxu0 0
    %1446 = vmatprep.subr.bf16.mxu0 0
    %1447 = vmatpush1.bf16.msra.mxu0 0
    %1448 = vmatprep.subr.bf16.mxu0 0
    %1449 = vmatpush1.bf16.msra.mxu0 0
    %1450 = vmatprep.subr.bf16.mxu0 0
    %1451 = vmatpush1.bf16.msra.mxu0 0
    %1452 = vmatprep.mubr.bf16.mxu0 0
    %1453 = vmatmul.mubr.bf16.gmra.mrb[0].mxu0 %v1378
    %v1454 = vpop.f32.mrb[0].mxu0
    %v1455 = vadd.f32 0.0, %v1454
    %v1456 = vpop.f32.mrb[0].mxu0
    %v1457 = vadd.f32 0.0, %v1456
    %v1458 = vpop.f32.mrb[0].mxu0
    %v1459 = vpop.f32.mrb[0].mxu0
    %1460 = vdwg.mxu0
    %v1461 = vadd.f32 %v888, %v1414
    %v1462 = vadd.f32 %v890, %v1416
    %v1463 = vadd.f32 %v949, %v1455
    %v1464 = vadd.f32 %v951, %v1457
    %v1465 = vxor.u32 %v1461, 2147483648
    %v1466 = vmul.f32 %v1465, 1.442695
    %v1467 = vpow.pop %v1466
    %v1468 = vadd.f32 %v1467, 1.0
    %v1469 = vrcp.pop %v1468
    %v1470 = vmul.f32 1.0, %v1469
    %v1471 = vxor.u32 %v1462, 2147483648
    %v1472 = vmul.f32 %v1471, 1.442695
    %v1473 = vpow.pop %v1472
    %v1474 = vadd.f32 %v1473, 1.0
    %v1475 = vrcp.pop %v1474
    %v1476 = vmul.f32 1.0, %v1475
    %v1477 = vtanh.pop %v1463
    %v1478 = vxor.u32 %v1464, 2147483648
    %v1479 = vmul.f32 %v1478, 1.442695
    %v1480 = vpow.pop %v1479
    %v1481 = vadd.f32 %v1480, 1.0
    %v1482 = vrcp.pop %v1481
    %v1483 = vmul.f32 1.0, %v1482
    %v1484 = vmul.f32 %v1476, %v1375
    %v1485 = vmul.f32 %v1470, %v1477
    %v1486 = vadd.f32 %v1484, %v1485
    %v1487 = vtanh.pop %v1486
    %v1488 = vmul.f32 %v1483, %v1487
    %v1489 = vpack.c.bf16 %v1488, %v1488
    %1490 = vmatprep.subr.bf16.mxu0 %v1094
    %1491 = vmatpush1.bf16.msra.mxu0 %v1093
    %1492 = vmatprep.subr.bf16.mxu0 %v1098
    %1493 = vmatpush1.bf16.msra.mxu0 %v1097
    %1494 = vmatprep.subr.bf16.mxu0 %v1102
    %1495 = vmatpush1.bf16.msra.mxu0 %v1101
    %1496 = vmatprep.subr.bf16.mxu0 %v1106
    %1497 = vmatpush1.bf16.msra.mxu0 %v1105
    %1498 = vmatprep.subr.bf16.mxu0 %v1110
    %1499 = vmatpush1.bf16.msra.mxu0 %v1109
    %1500 = vmatprep.subr.bf16.mxu0 %v1114
    %1501 = vmatpush1.bf16.msra.mxu0 %v1113
    %1502 = vmatprep.subr.bf16.mxu0 %v1118
    %1503 = vmatpush1.bf16.msra.mxu0 %v1117
    %1504 = vmatprep.subr.bf16.mxu0 %v1122
    %1505 = vmatpush1.bf16.msra.mxu0 %v1121
    %1506 = vmatprep.subr.bf16.mxu0 0
    %1507 = vmatpush1.bf16.msra.mxu0 0
    %1508 = vmatprep.subr.bf16.mxu0 0
    %1509 = vmatpush1.bf16.msra.mxu0 0
    %1510 = vmatprep.subr.bf16.mxu0 0
    %1511 = vmatpush1.bf16.msra.mxu0 0
    %1512 = vmatprep.subr.bf16.mxu0 0
    %1513 = vmatpush1.bf16.msra.mxu0 0
    %1514 = vmatprep.subr.bf16.mxu0 0
    %1515 = vmatpush1.bf16.msra.mxu0 0
    %1516 = vmatprep.subr.bf16.mxu0 0
    %1517 = vmatpush1.bf16.msra.mxu0 0
    %1518 = vmatprep.subr.bf16.mxu0 0
    %1519 = vmatpush1.bf16.msra.mxu0 0
    %1520 = vmatprep.subr.bf16.mxu0 0
    %1521 = vmatpush1.bf16.msra.mxu0 0
    %1522 = vmatprep.mubr.bf16.mxu0 0
    %1523 = vmatmul.mubr.bf16.gmra.mrb[0].mxu0 %v1489
    %v1524 = vpop.f32.mrb[0].mxu0
    %v1525 = vadd.f32 0.0, %v1524
    %v1526 = vpop.f32.mrb[0].mxu0
    %v1527 = vadd.f32 0.0, %v1526
    %v1528 = vpop.f32.mrb[0].mxu0
    %v1529 = vpop.f32.mrb[0].mxu0
    %1530 = vdwg.mxu0
    %1531 = vmatprep.subr.bf16.mxu0 %v1096
    %1532 = vmatpush1.bf16.msra.mxu0 %v1095
    %1533 = vmatprep.subr.bf16.mxu0 %v1100
    %1534 = vmatpush1.bf16.msra.mxu0 %v1099
    %1535 = vmatprep.subr.bf16.mxu0 %v1104
    %1536 = vmatpush1.bf16.msra.mxu0 %v1103
    %1537 = vmatprep.subr.bf16.mxu0 %v1108
    %1538 = vmatpush1.bf16.msra.mxu0 %v1107
    %1539 = vmatprep.subr.bf16.mxu0 %v1112
    %1540 = vmatpush1.bf16.msra.mxu0 %v1111
    %1541 = vmatprep.subr.bf16.mxu0 %v1116
    %1542 = vmatpush1.bf16.msra.mxu0 %v1115
    %1543 = vmatprep.subr.bf16.mxu0 %v1120
    %1544 = vmatpush1.bf16.msra.mxu0 %v1119
    %1545 = vmatprep.subr.bf16.mxu0 %v1124
    %1546 = vmatpush1.bf16.msra.mxu0 %v1123
    %1547 = vmatprep.subr.bf16.mxu0 0
    %1548 = vmatpush1.bf16.msra.mxu0 0
    %1549 = vmatprep.subr.bf16.mxu0 0
    %1550 = vmatpush1.bf16.msra.mxu0 0
    %1551 = vmatprep.subr.bf16.mxu0 0
    %1552 = vmatpush1.bf16.msra.mxu0 0
    %1553 = vmatprep.subr.bf16.mxu0 0
    %1554 = vmatpush1.bf16.msra.mxu0 0
    %1555 = vmatprep.subr.bf16.mxu0 0
    %1556 = vmatpush1.bf16.msra.mxu0 0
    %1557 = vmatprep.subr.bf16.mxu0 0
    %1558 = vmatpush1.bf16.msra.mxu0 0
    %1559 = vmatprep.subr.bf16.mxu0 0
    %1560 = vmatpush1.bf16.msra.mxu0 0
    %1561 = vmatprep.subr.bf16.mxu0 0
    %1562 = vmatpush1.bf16.msra.mxu0 0
    %1563 = vmatprep.mubr.bf16.mxu0 0
    %1564 = vmatmul.mubr.bf16.gmra.mrb[0].mxu0 %v1489
    %v1565 = vpop.f32.mrb[0].mxu0
    %v1566 = vadd.f32 0.0, %v1565
    %v1567 = vpop.f32.mrb[0].mxu0
    %v1568 = vadd.f32 0.0, %v1567
    %v1569 = vpop.f32.mrb[0].mxu0
    %v1570 = vpop.f32.mrb[0].mxu0
    %1571 = vdwg.mxu0
    %v1572 = vadd.f32 %v892, %v1525
    %v1573 = vadd.f32 %v894, %v1527
    %v1574 = vadd.f32 %v953, %v1566
    %v1575 = vadd.f32 %v955, %v1568
    %v1576 = vxor.u32 %v1572, 2147483648
    %v1577 = vmul.f32 %v1576, 1.442695
    %v1578 = vpow.pop %v1577
    %v1579 = vadd.f32 %v1578, 1.0
    %v1580 = vrcp.pop %v1579
    %v1581 = vmul.f32 1.0, %v1580
    %v1582 = vxor.u32 %v1573, 2147483648
    %v1583 = vmul.f32 %v1582, 1.442695
    %v1584 = vpow.pop %v1583
    %v1585 = vadd.f32 %v1584, 1.0
    %v1586 = vrcp.pop %v1585
    %v1587 = vmul.f32 1.0, %v1586
    %v1588 = vtanh.pop %v1574
    %v1589 = vxor.u32 %v1575, 2147483648
    %v1590 = vmul.f32 %v1589, 1.442695
    %v1591 = vpow.pop %v1590
    %v1592 = vadd.f32 %v1591, 1.0
    %v1593 = vrcp.pop %v1592
    %v1594 = vmul.f32 1.0, %v1593
    %v1595 = vmul.f32 %v1587, %v1486
    %v1596 = vmul.f32 %v1581, %v1588
    %v1597 = vadd.f32 %v1595, %v1596
    %v1598 = vtanh.pop %v1597
    %v1599 = vmul.f32 %v1594, %v1598
    %v1600 = vpack.c.bf16 %v1599, %v1599
    %1601 = vmatprep.subr.bf16.mxu0 %v1094
    %1602 = vmatpush1.bf16.msra.mxu0 %v1093
    %1603 = vmatprep.subr.bf16.mxu0 %v1098
    %1604 = vmatpush1.bf16.msra.mxu0 %v1097
    %1605 = vmatprep.subr.bf16.mxu0 %v1102
    %1606 = vmatpush1.bf16.msra.mxu0 %v1101
    %1607 = vmatprep.subr.bf16.mxu0 %v1106
    %1608 = vmatpush1.bf16.msra.mxu0 %v1105
    %1609 = vmatprep.subr.bf16.mxu0 %v1110
    %1610 = vmatpush1.bf16.msra.mxu0 %v1109
    %1611 = vmatprep.subr.bf16.mxu0 %v1114
    %1612 = vmatpush1.bf16.msra.mxu0 %v1113
    %1613 = vmatprep.subr.bf16.mxu0 %v1118
    %1614 = vmatpush1.bf16.msra.mxu0 %v1117
    %1615 = vmatprep.subr.bf16.mxu0 %v1122
    %1616 = vmatpush1.bf16.msra.mxu0 %v1121
    %1617 = vmatprep.subr.bf16.mxu0 0
    %1618 = vmatpush1.bf16.msra.mxu0 0
    %1619 = vmatprep.subr.bf16.mxu0 0
    %1620 = vmatpush1.bf16.msra.mxu0 0
    %1621 = vmatprep.subr.bf16.mxu0 0
    %1622 = vmatpush1.bf16.msra.mxu0 0
    %1623 = vmatprep.subr.bf16.mxu0 0
    %1624 = vmatpush1.bf16.msra.mxu0 0
    %1625 = vmatprep.subr.bf16.mxu0 0
    %1626 = vmatpush1.bf16.msra.mxu0 0
    %1627 = vmatprep.subr.bf16.mxu0 0
    %1628 = vmatpush1.bf16.msra.mxu0 0
    %1629 = vmatprep.subr.bf16.mxu0 0
    %1630 = vmatpush1.bf16.msra.mxu0 0
    %1631 = vmatprep.subr.bf16.mxu0 0
    %1632 = vmatpush1.bf16.msra.mxu0 0
    %1633 = vmatprep.mubr.bf16.mxu0 0
    %1634 = vmatmul.mubr.bf16.gmra.mrb[0].mxu0 %v1600
    %v1635 = vpop.f32.mrb[0].mxu0
    %v1636 = vadd.f32 0.0, %v1635
    %v1637 = vpop.f32.mrb[0].mxu0
    %v1638 = vadd.f32 0.0, %v1637
    %v1639 = vpop.f32.mrb[0].mxu0
    %v1640 = vpop.f32.mrb[0].mxu0
    %1641 = vdwg.mxu0
    %1642 = vmatprep.subr.bf16.mxu0 %v1096
    %1643 = vmatpush1.bf16.msra.mxu0 %v1095
    %1644 = vmatprep.subr.bf16.mxu0 %v1100
    %1645 = vmatpush1.bf16.msra.mxu0 %v1099
    %1646 = vmatprep.subr.bf16.mxu0 %v1104
    %1647 = vmatpush1.bf16.msra.mxu0 %v1103
    %1648 = vmatprep.subr.bf16.mxu0 %v1108
    %1649 = vmatpush1.bf16.msra.mxu0 %v1107
    %1650 = vmatprep.subr.bf16.mxu0 %v1112
    %1651 = vmatpush1.bf16.msra.mxu0 %v1111
    %1652 = vmatprep.subr.bf16.mxu0 %v1116
    %1653 = vmatpush1.bf16.msra.mxu0 %v1115
    %1654 = vmatprep.subr.bf16.mxu0 %v1120
    %1655 = vmatpush1.bf16.msra.mxu0 %v1119
    %1656 = vmatprep.subr.bf16.mxu0 %v1124
    %1657 = vmatpush1.bf16.msra.mxu0 %v1123
    %1658 = vmatprep.subr.bf16.mxu0 0
    %1659 = vmatpush1.bf16.msra.mxu0 0
    %1660 = vmatprep.subr.bf16.mxu0 0
    %1661 = vmatpush1.bf16.msra.mxu0 0
    %1662 = vmatprep.subr.bf16.mxu0 0
    %1663 = vmatpush1.bf16.msra.mxu0 0
    %1664 = vmatprep.subr.bf16.mxu0 0
    %1665 = vmatpush1.bf16.msra.mxu0 0
    %1666 = vmatprep.subr.bf16.mxu0 0
    %1667 = vmatpush1.bf16.msra.mxu0 0
    %1668 = vmatprep.subr.bf16.mxu0 0
    %1669 = vmatpush1.bf16.msra.mxu0 0
    %1670 = vmatprep.subr.bf16.mxu0 0
    %1671 = vmatpush1.bf16.msra.mxu0 0
    %1672 = vmatprep.subr.bf16.mxu0 0
    %1673 = vmatpush1.bf16.msra.mxu0 0
    %1674 = vmatprep.mubr.bf16.mxu0 0
    %1675 = vmatmul.mubr.bf16.gmra.mrb[0].mxu0 %v1600
    %v1676 = vpop.f32.mrb[0].mxu0
    %v1677 = vadd.f32 0.0, %v1676
    %v1678 = vpop.f32.mrb[0].mxu0
    %v1679 = vadd.f32 0.0, %v1678
    %v1680 = vpop.f32.mrb[0].mxu0
    %v1681 = vpop.f32.mrb[0].mxu0
    %1682 = vdwg.mxu0
    %v1683 = vadd.f32 %v898, %v1636
    %v1684 = vadd.f32 %v900, %v1638
    %v1685 = vadd.f32 %v959, %v1677
    %v1686 = vadd.f32 %v961, %v1679
    %v1687 = vxor.u32 %v1683, 2147483648
    %v1688 = vmul.f32 %v1687, 1.442695
    %v1689 = vpow.pop %v1688
    %v1690 = vadd.f32 %v1689, 1.0
    %v1691 = vrcp.pop %v1690
    %v1692 = vmul.f32 1.0, %v1691
    %v1693 = vxor.u32 %v1684, 2147483648
    %v1694 = vmul.f32 %v1693, 1.442695
    %v1695 = vpow.pop %v1694
    %v1696 = vadd.f32 %v1695, 1.0
    %v1697 = vrcp.pop %v1696
    %v1698 = vmul.f32 1.0, %v1697
    %v1699 = vtanh.pop %v1685
    %v1700 = vxor.u32 %v1686, 2147483648
    %v1701 = vmul.f32 %v1700, 1.442695
    %v1702 = vpow.pop %v1701
    %v1703 = vadd.f32 %v1702, 1.0
    %v1704 = vrcp.pop %v1703
    %v1705 = vmul.f32 1.0, %v1704
    %v1706 = vmul.f32 %v1698, %v1597
    %v1707 = vmul.f32 %v1692, %v1699
    %v1708 = vadd.f32 %v1706, %v1707
    %v1709 = vtanh.pop %v1708
    %v1710 = vmul.f32 %v1705, %v1709
    %s1711 = smul.u32 4, 16
    %s1712 = smul.u32 %s1711, 2
    %s1713 = sshll.u32 %s1712, 4
    %1714 = dma.done [#allocation3], %s1713
    %v1715 = vpack.c.bf16 %v1377, %v1266
    %v1716 = vpack.c.bf16 %v1599, %v1488
    %v1717 = vpack.c.bf16 %v1710, %v1710
    %v1718 = vld [vmem:[#allocation2] sm:$0xff]
    %v1719 = vld [vmem:[#allocation2 + $0x8] sm:$0xff]
    %v1720 = vld [vmem:[#allocation2 + $0x10] sm:$0xff]
    %v1721 = vld [vmem:[#allocation2 + $0x18] sm:$0xff]
    %v1722 = vld [vmem:[#allocation2 + $0x20] sm:$0xff]
    %v1723 = vld [vmem:[#allocation2 + $0x28] sm:$0xff]
    %v1724 = vld [vmem:[#allocation2 + $0x30] sm:$0xff]
    %v1725 = vld [vmem:[#allocation2 + $0x38] sm:$0xff]
    %v1726 = vld [vmem:[#allocation2 + $0x40] sm:$0xff]
    %v1727 = vld [vmem:[#allocation2 + $0x48] sm:$0xff]
    %v1728 = vld [vmem:[#allocation2 + $0x50] sm:$0xff]
    %v1729 = vld [vmem:[#allocation2 + $0x58] sm:$0xff]
    %v1730 = vld [vmem:[#allocation2 + $0x60] sm:$0xff]
    %v1731 = vld [vmem:[#allocation2 + $0x68] sm:$0xff]
    %v1732 = vld [vmem:[#allocation2 + $0x70] sm:$0xff]
    %v1733 = vld [vmem:[#allocation2 + $0x78] sm:$0xff]
    %v1734 = vld [vmem:[%s9] sm:$0x3]
    %v1736 = vlaneseq
    %v1737 = vshrl.u32 %v1736, 7
    %v1738 = vsub.s32 0, %v1737
    %v1739 = vrot.slane %v1734, %v1738
    %v1740 = vlaneseq
    %v1741 = vshrl.u32 %v1740, 7
    %v1742 = vsub.s32 1, %v1741
    %v1743 = vrot.slane %v1734, %v1742
    %1746 = vmatprep.subr.bf16.mxu0 %v1719
    %1747 = vmatpush1.bf16.msra.mxu0 %v1718
    %1748 = vmatprep.subr.bf16.mxu0 %v1721
    %1749 = vmatpush1.bf16.msra.mxu0 %v1720
    %1750 = vmatprep.subr.bf16.mxu0 %v1723
    %1751 = vmatpush1.bf16.msra.mxu0 %v1722
    %1752 = vmatprep.subr.bf16.mxu0 %v1725
    %1753 = vmatpush1.bf16.msra.mxu0 %v1724
    %1754 = vmatprep.subr.bf16.mxu0 %v1727
    %1755 = vmatpush1.bf16.msra.mxu0 %v1726
    %1756 = vmatprep.subr.bf16.mxu0 %v1729
    %1757 = vmatpush1.bf16.msra.mxu0 %v1728
    %1758 = vmatprep.subr.bf16.mxu0 %v1731
    %1759 = vmatpush1.bf16.msra.mxu0 %v1730
    %1760 = vmatprep.subr.bf16.mxu0 %v1733
    %1761 = vmatpush1.bf16.msra.mxu0 %v1732
    %1762 = vmatprep.subr.bf16.mxu0 0
    %1763 = vmatpush1.bf16.msra.mxu0 0
    %1764 = vmatprep.subr.bf16.mxu0 0
    %1765 = vmatpush1.bf16.msra.mxu0 0
    %1766 = vmatprep.subr.bf16.mxu0 0
    %1767 = vmatpush1.bf16.msra.mxu0 0
    %1768 = vmatprep.subr.bf16.mxu0 0
    %1769 = vmatpush1.bf16.msra.mxu0 0
    %1770 = vmatprep.subr.bf16.mxu0 0
    %1771 = vmatpush1.bf16.msra.mxu0 0
    %1772 = vmatprep.subr.bf16.mxu0 0
    %1773 = vmatpush1.bf16.msra.mxu0 0
    %1774 = vmatprep.subr.bf16.mxu0 0
    %1775 = vmatpush1.bf16.msra.mxu0 0
    %1776 = vmatprep.subr.bf16.mxu0 0
    %1777 = vmatpush1.bf16.msra.mxu0 0
    %1778 = vmatprep.mubr.bf16.mxu0 0
    %1779 = vmatmul.mubr.bf16.gmra.mrb[0].mxu0 %v1715
    %v1780 = vpop.f32.mrb[0].mxu0
    %v1781 = vadd.f32 %v1739, %v1780
    %v1782 = vpop.f32.mrb[0].mxu0
    %v1783 = vadd.f32 %v1743, %v1782
    %v1784 = vpop.f32.mrb[0].mxu0
    %v1785 = vadd.f32 %v1739, %v1784
    %v1786 = vpop.f32.mrb[0].mxu0
    %v1787 = vadd.f32 %v1743, %v1786
    %1788 = vmatprep.mubr.bf16.mxu0 0
    %1789 = vmatmul.mubr.bf16.gmra.mrb[0].mxu0 %v1716
    %v1790 = vpop.f32.mrb[0].mxu0
    %v1791 = vadd.f32 %v1739, %v1790
    %v1792 = vpop.f32.mrb[0].mxu0
    %v1793 = vadd.f32 %v1743, %v1792
    %v1794 = vpop.f32.mrb[0].mxu0
    %v1795 = vadd.f32 %v1739, %v1794
    %v1796 = vpop.f32.mrb[0].mxu0
    %v1797 = vadd.f32 %v1743, %v1796
    %1798 = vmatprep.mubr.bf16.mxu0 0
    %1799 = vmatmul.mubr.bf16.gmra.mrb[0].mxu0 %v1717
    %v1800 = vpop.f32.mrb[0].mxu0
    %v1801 = vadd.f32 %v1739, %v1800
    %v1802 = vpop.f32.mrb[0].mxu0
    %v1803 = vadd.f32 %v1743, %v1802
    %v1804 = vpop.f32.mrb[0].mxu0
    %v1805 = vpop.f32.mrb[0].mxu0
    %1806 = vdwg.mxu0
    %v1807 = vmax.f32 %v1781, %v1783
    %1808 = vmax.xlane.f32.xlu0 %v1807
    %v1809 = vpop.xlane.xlu0 %1808
    %v1810 = vmax.f32 %v1785, %v1787
    %1811 = vmax.xlane.f32.xlu0 %v1810
    %v1812 = vpop.xlane.xlu0 %1811
    %v1813 = vmax.f32 %v1791, %v1793
    %1814 = vmax.xlane.f32.xlu0 %v1813
    %v1815 = vpop.xlane.xlu0 %1814
    %v1816 = vmax.f32 %v1795, %v1797
    %1817 = vmax.xlane.f32.xlu0 %v1816
    %v1818 = vpop.xlane.xlu0 %1817
    %v1819 = vmax.f32 %v1801, %v1803
    %1820 = vmax.xlane.f32.xlu0 %v1819
    %v1821 = vpop.xlane.xlu0 %1820
    %v1822 = vsub.f32 %v1781, %v1809
    %v1823 = vsub.f32 %v1783, %v1809
    %v1824 = vsub.f32 %v1785, %v1812
    %v1825 = vsub.f32 %v1787, %v1812
    %v1826 = vsub.f32 %v1791, %v1815
    %v1827 = vsub.f32 %v1793, %v1815
    %v1828 = vsub.f32 %v1795, %v1818
    %v1829 = vsub.f32 %v1797, %v1818
    %v1830 = vsub.f32 %v1801, %v1821
    %v1831 = vsub.f32 %v1803, %v1821
    %v1832 = vmul.f32 %v1822, 1.442695
    %v1833 = vpow.pop %v1832
    %v1834 = vmul.f32 %v1823, 1.442695
    %v1835 = vpow.pop %v1834
    %v1836 = vmul.f32 %v1824, 1.442695
    %v1837 = vpow.pop %v1836
    %v1838 = vmul.f32 %v1825, 1.442695
    %v1839 = vpow.pop %v1838
    %v1840 = vmul.f32 %v1826, 1.442695
    %v1841 = vpow.pop %v1840
    %v1842 = vmul.f32 %v1827, 1.442695
    %v1843 = vpow.pop %v1842
    %v1844 = vmul.f32 %v1828, 1.442695
    %v1845 = vpow.pop %v1844
    %v1846 = vmul.f32 %v1829, 1.442695
    %v1847 = vpow.pop %v1846
    %v1848 = vmul.f32 %v1830, 1.442695
    %v1849 = vpow.pop %v1848
    %v1850 = vmul.f32 %v1831, 1.442695
    %v1851 = vpow.pop %v1850
    %v1852 = vadd.f32 %v1833, %v1835
    %1853 = vadd.xlane.f32.xlu0 %v1852
    %v1854 = vpop.xlane.xlu0 %1853
    %v1855 = vadd.f32 %v1837, %v1839
    %1856 = vadd.xlane.f32.xlu0 %v1855
    %v1857 = vpop.xlane.xlu0 %1856
    %v1858 = vadd.f32 %v1841, %v1843
    %1859 = vadd.xlane.f32.xlu0 %v1858
    %v1860 = vpop.xlane.xlu0 %1859
    %v1861 = vadd.f32 %v1845, %v1847
    %1862 = vadd.xlane.f32.xlu0 %v1861
    %v1863 = vpop.xlane.xlu0 %1862
    %v1864 = vadd.f32 %v1849, %v1851
    %1865 = vadd.xlane.f32.xlu0 %v1864
    %v1866 = vpop.xlane.xlu0 %1865
    %v1867 = vlog2.pop %v1854
    %v1868 = vmul.f32 %v1867, 0.6931472
    %v1869 = vlog2.pop %v1857
    %v1870 = vmul.f32 %v1869, 0.6931472
    %v1871 = vlog2.pop %v1860
    %v1872 = vmul.f32 %v1871, 0.6931472
    %v1873 = vlog2.pop %v1863
    %v1874 = vmul.f32 %v1873, 0.6931472
    %v1875 = vlog2.pop %v1866
    %v1876 = vmul.f32 %v1875, 0.6931472
    %v1877 = vadd.f32 %v1809, %v1868
    %v1878 = vadd.f32 %v1812, %v1870
    %v1879 = vadd.f32 %v1815, %v1872
    %v1880 = vadd.f32 %v1818, %v1874
    %v1881 = vadd.f32 %v1821, %v1876
    %v1882 = vsub.f32 %v1781, %v1877
    %v1883 = vsub.f32 %v1783, %v1877
    %v1884 = vsub.f32 %v1785, %v1878
    %v1885 = vsub.f32 %v1787, %v1878
    %v1886 = vsub.f32 %v1791, %v1879
    %v1887 = vsub.f32 %v1793, %v1879
    %v1888 = vsub.f32 %v1795, %v1880
    %v1889 = vsub.f32 %v1797, %v1880
    %v1890 = vsub.f32 %v1801, %v1881
    %v1891 = vsub.f32 %v1803, %v1881
    %1892 = vst [vmem:[#allocation15] sm:$0xff] %v1882
    %1893 = vst [vmem:[#allocation15 + $0x8] sm:$0xff] %v1883
    %1894 = vst [vmem:[#allocation15 + $0x10] sm:$0xff] %v1884
    %1895 = vst [vmem:[#allocation15 + $0x18] sm:$0xff] %v1885
    %1896 = vst [vmem:[#allocation15 + $0x20] sm:$0xff] %v1886
    %1897 = vst [vmem:[#allocation15 + $0x28] sm:$0xff] %v1887
    %1898 = vst [vmem:[#allocation15 + $0x30] sm:$0xff] %v1888
    %1899 = vst [vmem:[#allocation15 + $0x38] sm:$0xff] %v1889
    %1900 = vst [vmem:[#allocation15 + $0x40] sm:$0xff] %v1890
    %1901 = vst [vmem:[#allocation15 + $0x48] sm:$0xff] %v1891
    // Predicated region
    $region62: #{tpu_custom_call.1} parent=1 // pred_check
      _
    $region63: #{tpu_custom_call.1} parent=1 // pred_check_branch
      %1903 = sbr.rel (0) target = $region65
    $region64: #{tpu_custom_call.1} parent=1 // pred_region
      %s1905 = ssub.s32 1280, 1280
      %1906 = vsyncadd [#allocation6], %s1905
      %s1907 = sshll.u32 [#allocation15], 4
      %s1908 = int_to_ptr.vmem [resolvable:$true] %s1907
      %1913 = dma.vmem_to_hbm [thread:$0]  %s1908, 1280, %s10, [#allocation6], 256, 256, 16
    $region65: #{tpu_custom_call.1} parent=1 // pred_fallthru
      _
    // Predicated region
    $region66: #{tpu_custom_call.1} parent=1 // pred_check
      _
    $region67: #{tpu_custom_call.1} parent=1 // pred_check_branch
      %1915 = sbr.rel (0) target = $region69
    $region68: #{tpu_custom_call.1} parent=1 // pred_region
      %1916 = dma.done [#allocation6], 1280
    $region69: #{tpu_custom_call.1} parent=1 // pred_fallthru
      _
    %1917 = vsyncpa [#allocation5], 1
    %1918 = vsyncpa [#allocation8], 1
    %1919 = vsyncpa [#allocation11], 1
    %1920 = vsyncpa [#allocation14], 1
    %1921 = vsyncpa [#allocation6], 1
  %1922 = vsyncmov [#allocation3]
  %s1923 = vpop.sfrf %1922
  %p1924 = scmp.eq.s32.totalorder %s1923, 0
  %p1925 = pneg %p1924
  %1927 = shalt.err (%p1925)

</llo_original>
